<compile_context>
chip_gen: v5e
topology: v5e:2x2
jax: 0.10.0
libtpu: 0.0.40
codegen_flags: <defaults>
</compile_context>

<pallas_src>
import functools
import math

import numpy as np
import jax
import jax.numpy as jnp
from jax.experimental import pallas as pl
from jax.experimental.pallas import tpu as pltpu

NUM_PATCHES = 5
WINDOW_SIZE = 8          # power of two >= 2 (num_layers = log2(W))
WINDOW_HOP = 5
BN_EPS = 1e-5
CONV_K = 4               # ConvNormRelu(downsample=True): kernel=4, stride=2, pad=1


# ----------------------------------------------------------------------------- kernel
def _make_kernel(B, C, P, W, num_layers):
    """Kernel: window gather + fused ConvNormRelu stack + Linear.

    layout: feat_ref (B, T, C)   time on sublanes, channels on lanes
            activations (N, L*C) time flattened into lanes (lane = t*C + c)
            out_ref (N, C)       rows ordered n = p*B + b
    """
    N = P * B

    def kernel(starts_ref, feat_ref, *refs):
        m_refs = refs[0:num_layers]                      # banded conv weights (L*C, L_out*C)
        p_refs = refs[num_layers:2 * num_layers]         # 0/1 channel-projection matrices
        g_refs = refs[2 * num_layers:3 * num_layers]     # lane-tiled BN gamma (1, L_out*C)
        b_refs = refs[3 * num_layers:4 * num_layers]     # lane-tiled BN beta  (1, L_out*C)
        linw_ref, linb_ref, out_ref = refs[4 * num_layers:]

        def bn_relu(y, l, l_out):
            # training-mode BatchNorm1d stats over all N rows and l_out time positions:
            # one sublane reduce + one tiny 0/1 lane-group projection matmul per moment.
            inv_cnt = 1.0 / float(N * l_out)
            pm = p_refs[l][...]
            mean = jnp.dot(jnp.sum(y, axis=0, keepdims=True), pm,
                           preferred_element_type=jnp.float32) * inv_cnt
            d = y - mean
            var = jnp.dot(jnp.sum(d * d, axis=0, keepdims=True), pm,
                          preferred_element_type=jnp.float32) * inv_cnt
            inv = jax.lax.rsqrt(var + BN_EPS)
            # Dropout(p=0) is identity; ReLU.
            return jnp.maximum(d * (inv * g_refs[l][...]) + b_refs[l][...], 0.0)

        # ---- patch gather: P dynamic slices along the (sublane) time dim ----
        windows = [feat_ref[:, pl.ds(starts_ref[p], W), :] for p in range(P)]
        all_win = jnp.concatenate(windows, axis=0)        # (N, W, C), rows n = p*B + b

        # ---- layer 0: banded conv, weight consumed in K=C row blocks (one per
        #      window time step) -> no sublane->lane relayout of the window,
        #      output is produced directly in the lane-dense (N, (W/2)*C) form ----
        m0 = m_refs[0]
        taps = [jnp.dot(all_win[:, t, :], m0[t * C:(t + 1) * C, :],
                        preferred_element_type=jnp.float32) for t in range(W)]
        y = functools.reduce(lambda a, b: a + b, taps)    # (N, (W//2)*C)
        x = bn_relu(y, 0, W // 2)
        L = W // 2

        # ---- layers 1..: ONE lane-dense banded matmul per ConvNormRelu ----
        for l in range(1, num_layers):
            L_out = L // 2
            y = jnp.dot(x, m_refs[l][...], preferred_element_type=jnp.float32)
            x = bn_relu(y, l, L_out)
            L = L_out

        # TODO(synk): num_layers == 0 branch (window_size == 1, ConvNormRelu k=1,s=1)
        # is not implemented (guarded in pack_params).
        # ---- Transpose -> Linear(C, C) -> Transpose (L == 1 here) ----
        out_ref[...] = (jnp.dot(x, linw_ref[...], preferred_element_type=jnp.float32)
                        + linb_ref[...])

    return kernel


# ----------------------------------------------------------------------------- wrapper
def temporal_patch_mlp(feat_nct, starts_sel, packed):
    """feat_nct: (B, C, T) float32 (PyTorch NCT). Returns (B, C, 1, P)."""
    B, C, T = feat_nct.shape
    P = starts_sel.shape[0]
    W = WINDOW_SIZE
    N = P * B
    M_list, P_list, g_list, b_list, lin_w, lin_b = packed
    num_layers = len(M_list)

    feat_tc = jnp.transpose(feat_nct, (0, 2, 1))                      # (B, T, C)
    # guard against out-of-range caller-supplied patch ids (VMEM reads are unchecked)
    starts_sel = jnp.clip(starts_sel.astype(jnp.int32), 0, T - W)

    def full_spec(a):
        nd = a.ndim
        return pl.BlockSpec(a.shape, lambda i: (0,) * nd)

    out = pl.pallas_call(
        _make_kernel(B, C, P, W, num_layers),
        grid=(1,),
        in_specs=(
            [pl.BlockSpec(memory_space=pltpu.MemorySpace.SMEM),       # starts (P,)
             pl.BlockSpec((B, T, C), lambda i: (0, 0, 0))]            # feat (B,T,C)
            + [full_spec(m) for m in M_list]
            + [full_spec(p) for p in P_list]
            + [full_spec(g) for g in g_list]
            + [full_spec(b) for b in b_list]
            + [full_spec(lin_w), full_spec(lin_b)]
        ),
        out_specs=pl.BlockSpec((N, C), lambda i: (0, 0)),
        out_shape=jax.ShapeDtypeStruct((N, C), jnp.float32),
        compiler_params=pltpu.CompilerParams(dimension_semantics=("arbitrary",)),
        # TODO(synk): fold multiple feature maps (padded to max C) and a two-pass BN
        # into a "parallel" grid axis so v7x's second TensorCore gets used; with
        # training-mode BN coupling all N rows, a single grid step is kept here.
    )(starts_sel, feat_tc, *M_list, *P_list, *g_list, *b_list, lin_w, lin_b)

    out = out.reshape(P, B, C)                                        # kernel rows: n = p*B + b
    return jnp.transpose(out, (1, 2, 0))[:, :, None, :]               # (B, C, 1, P)


# ----------------------------------------------------------------------------- params
def init_mlp_params(key, C):
    """Deterministic synthetic init matching the module's parameter shapes."""
    num_layers = int(math.log2(WINDOW_SIZE))
    ks = jax.random.split(key, 6)
    conv_w = jax.random.normal(ks[0], (num_layers, CONV_K, C, C), jnp.float32) / math.sqrt(C * CONV_K)
    conv_b = 0.1 * jax.random.normal(ks[1], (num_layers, 1, C), jnp.float32)   # nonzero: cancels in BN
    bn_g = 1.0 + 0.1 * jax.random.normal(ks[2], (num_layers, 1, C), jnp.float32)
    bn_b = 0.1 * jax.random.normal(ks[3], (num_layers, 1, C), jnp.float32)
    lin_w = jax.random.normal(ks[4], (C, C), jnp.float32) / math.sqrt(C)
    lin_b = 0.1 * jax.random.normal(ks[5], (1, C), jnp.float32)
    return conv_w, conv_b, bn_g, bn_b, lin_w, lin_b


def pack_params(params):
    """Host-side, one-time repack of module params into kernel-ready slabs.

    * conv weights -> banded/Toeplitz (L*C, L_out*C) matrices (k=4, stride 2, pad 1 baked in)
    * conv biases  -> dropped (a per-channel constant cancels under training-mode BN)
    * BN gamma/beta -> lane-tiled (1, L_out*C) rows
    * 0/1 channel-projection matrices for the BN batch statistics
    """
    conv_w, _conv_b, bn_g, bn_b, lin_w, lin_b = params
    conv_w = np.asarray(conv_w, np.float32)
    bn_g = np.asarray(bn_g, np.float32)
    bn_b = np.asarray(bn_b, np.float32)
    num_layers, K, C, _ = conv_w.shape
    assert num_layers >= 1 and WINDOW_SIZE == 2 ** num_layers, (
        "window_size == 1 (num_layers == 0) path not implemented")

    M_list, P_list, g_list, b_list = [], [], [], []
    L = WINDOW_SIZE
    for l in range(num_layers):
        L_out = L // 2
        M = np.zeros((L * C, L_out * C), np.float32)
        for t_out in range(L_out):
            for k in range(K):
                t_in = 2 * t_out + k - 1                 # stride 2, padding 1
                if 0 <= t_in < L:
                    M[t_in * C:(t_in + 1) * C, t_out * C:(t_out + 1) * C] = conv_w[l, k]
        lane = np.arange(L_out * C)
        proj = (lane[:, None] % C == lane[None, :] % C).astype(np.float32)
        M_list.append(jnp.asarray(M))
        P_list.append(jnp.asarray(proj))
        g_list.append(jnp.asarray(np.tile(bn_g[l].reshape(C), L_out)[None, :]))
        b_list.append(jnp.asarray(np.tile(bn_b[l].reshape(C), L_out)[None, :]))
        L = L_out
    return (tuple(M_list), tuple(P_list), tuple(g_list), tuple(b_list),
            jnp.asarray(lin_w), jnp.asarray(lin_b))


# ----------------------------------------------------------------------------- forward
def temporal_patches_forward(feats, key, packed_list, patch_ids=None):
    feats = [f for f in feats if f.shape[2] - WINDOW_SIZE > WINDOW_HOP]      # filter_feats
    return_feats, return_ids = [], []
    for idx, feat in enumerate(feats):
        T = feat.shape[2]
        starts = jnp.arange(0, T - WINDOW_SIZE, WINDOW_HOP, dtype=jnp.int32)
        if patch_ids is None:
            key, sub = jax.random.split(key)
            patch_id = jax.random.permutation(sub, starts.shape[0])[:NUM_PATCHES]
        else:
            patch_id = patch_ids[idx]
        starts_sel = starts[patch_id].astype(jnp.int32)
        return_feats.append(temporal_patch_mlp(feat, starts_sel, packed_list[idx]))
        return_ids.append(patch_id)
    return return_feats, return_ids


# ----------------------------------------------------------------------------- reference
def reference_forward(feat, starts_sel, params):
    """Pure-JAX reference mirroring the PyTorch forward (torch n = b*P + p ordering)."""
    B, C, T = feat.shape
    P = starts_sel.shape[0]
    W = WINDOW_SIZE
    conv_w, conv_b, bn_g, bn_b, lin_w, lin_b = params
    s_list = [int(s) for s in np.asarray(jax.device_get(starts_sel))]
    patches = jnp.stack([jax.lax.dynamic_slice(feat, (0, 0, s), (B, C, W)) for s in s_list],
                        axis=1)                                             # (B, P, C, W)
    x = patches.reshape(B * P, C, W)
    for l in range(int(math.log2(W))):
        w_oik = jnp.transpose(conv_w[l], (2, 1, 0))                         # (O, I, K)
        x = jax.lax.conv_general_dilated(x, w_oik, (2,), ((1, 1),),
                                         dimension_numbers=('NCH', 'OIH', 'NCH'))
        x = x + conv_b[l].reshape(1, C, 1)
        mean = x.mean(axis=(0, 2), keepdims=True)
        var = ((x - mean) ** 2).mean(axis=(0, 2), keepdims=True)
        x = (x - mean) / jnp.sqrt(var + BN_EPS)
        x = x * bn_g[l].reshape(1, C, 1) + bn_b[l].reshape(1, C, 1)
        x = jnp.maximum(x, 0.0)
    xt = jnp.swapaxes(x, 1, 2)                                              # (N, 1, C)
    y = xt @ lin_w + lin_b
    y = jnp.swapaxes(y, 1, 2)                                               # (N, C, 1)
    return y.reshape(B, P, C, 1).transpose(0, 2, 3, 1)                      # (B, C, 1, P)


# ----------------------------------------------------------------------------- main
if __name__ == "__main__":
    key = jax.random.PRNGKey(0)
    k_f1, k_f2, k_p1, k_p2, k_id = jax.random.split(key, 5)
    feats = [
        jax.random.normal(k_f1, (2, 32, 64), jnp.float32),   # (B, C, T)
        jax.random.normal(k_f2, (2, 16, 48), jnp.float32),
    ]
    params_list = [init_mlp_params(k_p1, 32), init_mlp_params(k_p2, 16)]
    packed_list = [pack_params(p) for p in params_list]      # host-side one-time repack

    fwd = jax.jit(temporal_patches_forward)                  # fuse launches + layout glue
    out_feats, out_ids = fwd(feats, k_id, packed_list)
    out_feats = [jax.block_until_ready(o) for o in out_feats]

    ok = True
    for idx, (feat, patch_id) in enumerate(zip(feats, out_ids)):
        T = feat.shape[2]
        starts = jnp.arange(0, T - WINDOW_SIZE, WINDOW_HOP, dtype=jnp.int32)
        ref = reference_forward(feat, starts[patch_id], params_list[idx])
        assert out_feats[idx].shape == ref.shape
        ok &= bool(jnp.allclose(out_feats[idx], ref, atol=3e-3, rtol=3e-3))

    if ok:
        print("KERNEL_OK")
    else:
        print("MISMATCH")
</pallas_src>

<mosaic_0001>
module attributes {stable_mosaic.version = 11 : i64} {
  func.func @kernel(%arg0: i32, %arg1: memref<5xi32, #tpu.memory_space<smem>>, %arg2: memref<2x48x16xf32, #tpu.memory_space<vmem>>, %arg3: memref<128x64xf32, #tpu.memory_space<vmem>>, %arg4: memref<64x32xf32, #tpu.memory_space<vmem>>, %arg5: memref<32x16xf32, #tpu.memory_space<vmem>>, %arg6: memref<64x64xf32, #tpu.memory_space<vmem>>, %arg7: memref<32x32xf32, #tpu.memory_space<vmem>>, %arg8: memref<16x16xf32, #tpu.memory_space<vmem>>, %arg9: memref<1x64xf32, #tpu.memory_space<vmem>>, %arg10: memref<1x32xf32, #tpu.memory_space<vmem>>, %arg11: memref<1x16xf32, #tpu.memory_space<vmem>>, %arg12: memref<1x64xf32, #tpu.memory_space<vmem>>, %arg13: memref<1x32xf32, #tpu.memory_space<vmem>>, %arg14: memref<1x16xf32, #tpu.memory_space<vmem>>, %arg15: memref<16x16xf32, #tpu.memory_space<vmem>>, %arg16: memref<1x16xf32, #tpu.memory_space<vmem>>, %arg17: memref<10x16xf32, #tpu.memory_space<vmem>>) attributes {dimension_semantics = [#tpu.dimension_semantics<arbitrary>], iteration_bounds = array<i64: 1>, scalar_prefetch = 0 : i64, scratch_operands = 0 : i64, tpu.core_type = #tpu.core_type<tc>, window_params = [{transform_indices = @transform_0, window_bounds = array<i64: 5>}, {pipeline_mode = #tpu.pipeline_mode<synchronous>, transform_indices = @transform_1, window_bounds = array<i64: 2, 48, 16>}, {pipeline_mode = #tpu.pipeline_mode<synchronous>, transform_indices = @transform_2, window_bounds = array<i64: 128, 64>}, {pipeline_mode = #tpu.pipeline_mode<synchronous>, transform_indices = @transform_3, window_bounds = array<i64: 64, 32>}, {pipeline_mode = #tpu.pipeline_mode<synchronous>, transform_indices = @transform_4, window_bounds = array<i64: 32, 16>}, {pipeline_mode = #tpu.pipeline_mode<synchronous>, transform_indices = @transform_5, window_bounds = array<i64: 64, 64>}, {pipeline_mode = #tpu.pipeline_mode<synchronous>, transform_indices = @transform_6, window_bounds = array<i64: 32, 32>}, {pipeline_mode = #tpu.pipeline_mode<synchronous>, transform_indices = @transform_7, window_bounds = array<i64: 16, 16>}, {pipeline_mode = #tpu.pipeline_mode<synchronous>, transform_indices = @transform_8, window_bounds = array<i64: 1, 64>}, {pipeline_mode = #tpu.pipeline_mode<synchronous>, transform_indices = @transform_9, window_bounds = array<i64: 1, 32>}, {pipeline_mode = #tpu.pipeline_mode<synchronous>, transform_indices = @transform_10, window_bounds = array<i64: 1, 16>}, {pipeline_mode = #tpu.pipeline_mode<synchronous>, transform_indices = @transform_11, window_bounds = array<i64: 1, 64>}, {pipeline_mode = #tpu.pipeline_mode<synchronous>, transform_indices = @transform_12, window_bounds = array<i64: 1, 32>}, {pipeline_mode = #tpu.pipeline_mode<synchronous>, transform_indices = @transform_13, window_bounds = array<i64: 1, 16>}, {pipeline_mode = #tpu.pipeline_mode<synchronous>, transform_indices = @transform_14, window_bounds = array<i64: 16, 16>}, {pipeline_mode = #tpu.pipeline_mode<synchronous>, transform_indices = @transform_15, window_bounds = array<i64: 1, 16>}, {pipeline_mode = #tpu.pipeline_mode<synchronous>, transform_indices = @transform_16, window_bounds = array<i64: 10, 16>}]} {
    %c0 = arith.constant 0 : index
    %0 = memref.load %arg1[%c0] : memref<5xi32, #tpu.memory_space<smem>>
    %c0_0 = arith.constant 0 : index
    %1 = arith.index_cast %0 : i32 to index
    %c0_1 = arith.constant 0 : index
    %2 = vector.load %arg2[%c0_0, %1, %c0_1] : memref<2x48x16xf32, #tpu.memory_space<vmem>>, vector<2x8x16xf32>
    %c1 = arith.constant 1 : index
    %3 = memref.load %arg1[%c1] : memref<5xi32, #tpu.memory_space<smem>>
    %c0_2 = arith.constant 0 : index
    %4 = arith.index_cast %3 : i32 to index
    %c0_3 = arith.constant 0 : index
    %5 = vector.load %arg2[%c0_2, %4, %c0_3] : memref<2x48x16xf32, #tpu.memory_space<vmem>>, vector<2x8x16xf32>
    %c2 = arith.constant 2 : index
    %6 = memref.load %arg1[%c2] : memref<5xi32, #tpu.memory_space<smem>>
    %c0_4 = arith.constant 0 : index
    %7 = arith.index_cast %6 : i32 to index
    %c0_5 = arith.constant 0 : index
    %8 = vector.load %arg2[%c0_4, %7, %c0_5] : memref<2x48x16xf32, #tpu.memory_space<vmem>>, vector<2x8x16xf32>
    %c3 = arith.constant 3 : index
    %9 = memref.load %arg1[%c3] : memref<5xi32, #tpu.memory_space<smem>>
    %c0_6 = arith.constant 0 : index
    %10 = arith.index_cast %9 : i32 to index
    %c0_7 = arith.constant 0 : index
    %11 = vector.load %arg2[%c0_6, %10, %c0_7] : memref<2x48x16xf32, #tpu.memory_space<vmem>>, vector<2x8x16xf32>
    %c4 = arith.constant 4 : index
    %12 = memref.load %arg1[%c4] : memref<5xi32, #tpu.memory_space<smem>>
    %c0_8 = arith.constant 0 : index
    %13 = arith.index_cast %12 : i32 to index
    %c0_9 = arith.constant 0 : index
    %14 = vector.load %arg2[%c0_8, %13, %c0_9] : memref<2x48x16xf32, #tpu.memory_space<vmem>>, vector<2x8x16xf32>
    %15 = tpu.concatenate %2, %5, %8, %11, %14 in 0 : vector<2x8x16xf32>, vector<2x8x16xf32>, vector<2x8x16xf32>, vector<2x8x16xf32>, vector<2x8x16xf32> -> vector<10x8x16xf32>
    %16 = vector.extract_strided_slice %15 {offsets = [0, 0, 0], sizes = [10, 1, 16], strides = [1, 1, 1]} : vector<10x8x16xf32> to vector<10x1x16xf32>
    %17 = vector.shape_cast %16 : vector<10x1x16xf32> to vector<10x16xf32>
    %c0_10 = arith.constant 0 : index
    %c0_11 = arith.constant 0 : index
    %18 = vector.load %arg3[%c0_10, %c0_11] : memref<128x64xf32, #tpu.memory_space<vmem>>, vector<16x64xf32>
    %cst = arith.constant dense<0.000000e+00> : vector<10x64xf32>
    %19 = tpu.matmul %17, %18, %cst {dimension_numbers = #tpu.dot_dimension_numbers<[1], [0], [0], [1], [0, 0, 1, 1], [], []>} : vector<10x16xf32>, vector<16x64xf32>, vector<10x64xf32> -> vector<10x64xf32>
    %20 = vector.extract_strided_slice %15 {offsets = [0, 1, 0], sizes = [10, 1, 16], strides = [1, 1, 1]} : vector<10x8x16xf32> to vector<10x1x16xf32>
    %21 = vector.shape_cast %20 : vector<10x1x16xf32> to vector<10x16xf32>
    %c16 = arith.constant 16 : index
    %c0_12 = arith.constant 0 : index
    %22 = vector.load %arg3[%c16, %c0_12] : memref<128x64xf32, #tpu.memory_space<vmem>>, vector<16x64xf32>
    %cst_13 = arith.constant dense<0.000000e+00> : vector<10x64xf32>
    %23 = tpu.matmul %21, %22, %cst_13 {dimension_numbers = #tpu.dot_dimension_numbers<[1], [0], [0], [1], [0, 0, 1, 1], [], []>} : vector<10x16xf32>, vector<16x64xf32>, vector<10x64xf32> -> vector<10x64xf32>
    %24 = vector.extract_strided_slice %15 {offsets = [0, 2, 0], sizes = [10, 1, 16], strides = [1, 1, 1]} : vector<10x8x16xf32> to vector<10x1x16xf32>
    %25 = vector.shape_cast %24 : vector<10x1x16xf32> to vector<10x16xf32>
    %c32 = arith.constant 32 : index
    %c0_14 = arith.constant 0 : index
    %26 = vector.load %arg3[%c32, %c0_14] : memref<128x64xf32, #tpu.memory_space<vmem>>, vector<16x64xf32>
    %cst_15 = arith.constant dense<0.000000e+00> : vector<10x64xf32>
    %27 = tpu.matmul %25, %26, %cst_15 {dimension_numbers = #tpu.dot_dimension_numbers<[1], [0], [0], [1], [0, 0, 1, 1], [], []>} : vector<10x16xf32>, vector<16x64xf32>, vector<10x64xf32> -> vector<10x64xf32>
    %28 = vector.extract_strided_slice %15 {offsets = [0, 3, 0], sizes = [10, 1, 16], strides = [1, 1, 1]} : vector<10x8x16xf32> to vector<10x1x16xf32>
    %29 = vector.shape_cast %28 : vector<10x1x16xf32> to vector<10x16xf32>
    %c48 = arith.constant 48 : index
    %c0_16 = arith.constant 0 : index
    %30 = vector.load %arg3[%c48, %c0_16] : memref<128x64xf32, #tpu.memory_space<vmem>>, vector<16x64xf32>
    %cst_17 = arith.constant dense<0.000000e+00> : vector<10x64xf32>
    %31 = tpu.matmul %29, %30, %cst_17 {dimension_numbers = #tpu.dot_dimension_numbers<[1], [0], [0], [1], [0, 0, 1, 1], [], []>} : vector<10x16xf32>, vector<16x64xf32>, vector<10x64xf32> -> vector<10x64xf32>
    %32 = vector.extract_strided_slice %15 {offsets = [0, 4, 0], sizes = [10, 1, 16], strides = [1, 1, 1]} : vector<10x8x16xf32> to vector<10x1x16xf32>
    %33 = vector.shape_cast %32 : vector<10x1x16xf32> to vector<10x16xf32>
    %c64 = arith.constant 64 : index
    %c0_18 = arith.constant 0 : index
    %34 = vector.load %arg3[%c64, %c0_18] : memref<128x64xf32, #tpu.memory_space<vmem>>, vector<16x64xf32>
    %cst_19 = arith.constant dense<0.000000e+00> : vector<10x64xf32>
    %35 = tpu.matmul %33, %34, %cst_19 {dimension_numbers = #tpu.dot_dimension_numbers<[1], [0], [0], [1], [0, 0, 1, 1], [], []>} : vector<10x16xf32>, vector<16x64xf32>, vector<10x64xf32> -> vector<10x64xf32>
    %36 = vector.extract_strided_slice %15 {offsets = [0, 5, 0], sizes = [10, 1, 16], strides = [1, 1, 1]} : vector<10x8x16xf32> to vector<10x1x16xf32>
    %37 = vector.shape_cast %36 : vector<10x1x16xf32> to vector<10x16xf32>
    %c80 = arith.constant 80 : index
    %c0_20 = arith.constant 0 : index
    %38 = vector.load %arg3[%c80, %c0_20] : memref<128x64xf32, #tpu.memory_space<vmem>>, vector<16x64xf32>
    %cst_21 = arith.constant dense<0.000000e+00> : vector<10x64xf32>
    %39 = tpu.matmul %37, %38, %cst_21 {dimension_numbers = #tpu.dot_dimension_numbers<[1], [0], [0], [1], [0, 0, 1, 1], [], []>} : vector<10x16xf32>, vector<16x64xf32>, vector<10x64xf32> -> vector<10x64xf32>
    %40 = vector.extract_strided_slice %15 {offsets = [0, 6, 0], sizes = [10, 1, 16], strides = [1, 1, 1]} : vector<10x8x16xf32> to vector<10x1x16xf32>
    %41 = vector.shape_cast %40 : vector<10x1x16xf32> to vector<10x16xf32>
    %c96 = arith.constant 96 : index
    %c0_22 = arith.constant 0 : index
    %42 = vector.load %arg3[%c96, %c0_22] : memref<128x64xf32, #tpu.memory_space<vmem>>, vector<16x64xf32>
    %cst_23 = arith.constant dense<0.000000e+00> : vector<10x64xf32>
    %43 = tpu.matmul %41, %42, %cst_23 {dimension_numbers = #tpu.dot_dimension_numbers<[1], [0], [0], [1], [0, 0, 1, 1], [], []>} : vector<10x16xf32>, vector<16x64xf32>, vector<10x64xf32> -> vector<10x64xf32>
    %44 = vector.extract_strided_slice %15 {offsets = [0, 7, 0], sizes = [10, 1, 16], strides = [1, 1, 1]} : vector<10x8x16xf32> to vector<10x1x16xf32>
    %45 = vector.shape_cast %44 : vector<10x1x16xf32> to vector<10x16xf32>
    %c112 = arith.constant 112 : index
    %c0_24 = arith.constant 0 : index
    %46 = vector.load %arg3[%c112, %c0_24] : memref<128x64xf32, #tpu.memory_space<vmem>>, vector<16x64xf32>
    %cst_25 = arith.constant dense<0.000000e+00> : vector<10x64xf32>
    %47 = tpu.matmul %45, %46, %cst_25 {dimension_numbers = #tpu.dot_dimension_numbers<[1], [0], [0], [1], [0, 0, 1, 1], [], []>} : vector<10x16xf32>, vector<16x64xf32>, vector<10x64xf32> -> vector<10x64xf32>
    %48 = arith.addf %19, %23 : vector<10x64xf32>
    %49 = arith.addf %48, %27 : vector<10x64xf32>
    %50 = arith.addf %49, %31 : vector<10x64xf32>
    %51 = arith.addf %50, %35 : vector<10x64xf32>
    %52 = arith.addf %51, %39 : vector<10x64xf32>
    %53 = arith.addf %52, %43 : vector<10x64xf32>
    %54 = arith.addf %53, %47 : vector<10x64xf32>
    %c0_26 = arith.constant 0 : index
    %c0_27 = arith.constant 0 : index
    %55 = vector.load %arg6[%c0_26, %c0_27] : memref<64x64xf32, #tpu.memory_space<vmem>>, vector<64x64xf32>
    %cst_28 = arith.constant dense<0.000000e+00> : vector<64xf32>
    %56 = vector.multi_reduction <add>, %54, %cst_28 [0] : vector<10x64xf32> to vector<64xf32>
    %57 = vector.shape_cast %56 : vector<64xf32> to vector<1x64xf32>
    %cst_29 = arith.constant dense<0.000000e+00> : vector<1x64xf32>
    %58 = tpu.matmul %57, %55, %cst_29 {dimension_numbers = #tpu.dot_dimension_numbers<[1], [0], [0], [1], [0, 0, 1, 1], [], []>} : vector<1x64xf32>, vector<64x64xf32>, vector<1x64xf32> -> vector<1x64xf32>
    %cst_30 = arith.constant 2.500000e-02 : f32
    %59 = vector.broadcast %cst_30 : f32 to vector<1x64xf32>
    %60 = arith.mulf %58, %59 : vector<1x64xf32>
    %61 = vector.broadcast %60 : vector<1x64xf32> to vector<10x64xf32>
    %62 = arith.subf %54, %61 : vector<10x64xf32>
    %63 = arith.mulf %62, %62 : vector<10x64xf32>
    %cst_31 = arith.constant dense<0.000000e+00> : vector<64xf32>
    %64 = vector.multi_reduction <add>, %63, %cst_31 [0] : vector<10x64xf32> to vector<64xf32>
    %65 = vector.shape_cast %64 : vector<64xf32> to vector<1x64xf32>
    %cst_32 = arith.constant dense<0.000000e+00> : vector<1x64xf32>
    %66 = tpu.matmul %65, %55, %cst_32 {dimension_numbers = #tpu.dot_dimension_numbers<[1], [0], [0], [1], [0, 0, 1, 1], [], []>} : vector<1x64xf32>, vector<64x64xf32>, vector<1x64xf32> -> vector<1x64xf32>
    %cst_33 = arith.constant 2.500000e-02 : f32
    %67 = vector.broadcast %cst_33 : f32 to vector<1x64xf32>
    %68 = arith.mulf %66, %67 : vector<1x64xf32>
    %cst_34 = arith.constant 9.99999974E-6 : f32
    %69 = vector.broadcast %cst_34 : f32 to vector<1x64xf32>
    %70 = arith.addf %68, %69 : vector<1x64xf32>
    %71 = math.rsqrt %70 : vector<1x64xf32>
    %c0_35 = arith.constant 0 : index
    %c0_36 = arith.constant 0 : index
    %72 = vector.load %arg9[%c0_35, %c0_36] : memref<1x64xf32, #tpu.memory_space<vmem>>, vector<1x64xf32>
    %73 = arith.mulf %71, %72 : vector<1x64xf32>
    %74 = vector.broadcast %73 : vector<1x64xf32> to vector<10x64xf32>
    %75 = arith.mulf %62, %74 : vector<10x64xf32>
    %c0_37 = arith.constant 0 : index
    %c0_38 = arith.constant 0 : index
    %76 = vector.load %arg12[%c0_37, %c0_38] : memref<1x64xf32, #tpu.memory_space<vmem>>, vector<1x64xf32>
    %77 = vector.broadcast %76 : vector<1x64xf32> to vector<10x64xf32>
    %78 = arith.addf %75, %77 : vector<10x64xf32>
    %cst_39 = arith.constant 0.000000e+00 : f32
    %79 = vector.broadcast %cst_39 : f32 to vector<10x64xf32>
    %80 = arith.maximumf %78, %79 : vector<10x64xf32>
    %c0_40 = arith.constant 0 : index
    %c0_41 = arith.constant 0 : index
    %81 = vector.load %arg4[%c0_40, %c0_41] : memref<64x32xf32, #tpu.memory_space<vmem>>, vector<64x32xf32>
    %cst_42 = arith.constant dense<0.000000e+00> : vector<10x32xf32>
    %82 = tpu.matmul %80, %81, %cst_42 {dimension_numbers = #tpu.dot_dimension_numbers<[1], [0], [0], [1], [0, 0, 1, 1], [], []>} : vector<10x64xf32>, vector<64x32xf32>, vector<10x32xf32> -> vector<10x32xf32>
    %c0_43 = arith.constant 0 : index
    %c0_44 = arith.constant 0 : index
    %83 = vector.load %arg7[%c0_43, %c0_44] : memref<32x32xf32, #tpu.memory_space<vmem>>, vector<32x32xf32>
    %cst_45 = arith.constant dense<0.000000e+00> : vector<32xf32>
    %84 = vector.multi_reduction <add>, %82, %cst_45 [0] : vector<10x32xf32> to vector<32xf32>
    %85 = vector.shape_cast %84 : vector<32xf32> to vector<1x32xf32>
    %cst_46 = arith.constant dense<0.000000e+00> : vector<1x32xf32>
    %86 = tpu.matmul %85, %83, %cst_46 {dimension_numbers = #tpu.dot_dimension_numbers<[1], [0], [0], [1], [0, 0, 1, 1], [], []>} : vector<1x32xf32>, vector<32x32xf32>, vector<1x32xf32> -> vector<1x32xf32>
    %cst_47 = arith.constant 5.000000e-02 : f32
    %87 = vector.broadcast %cst_47 : f32 to vector<1x32xf32>
    %88 = arith.mulf %86, %87 : vector<1x32xf32>
    %89 = vector.broadcast %88 : vector<1x32xf32> to vector<10x32xf32>
    %90 = arith.subf %82, %89 : vector<10x32xf32>
    %91 = arith.mulf %90, %90 : vector<10x32xf32>
    %cst_48 = arith.constant dense<0.000000e+00> : vector<32xf32>
    %92 = vector.multi_reduction <add>, %91, %cst_48 [0] : vector<10x32xf32> to vector<32xf32>
    %93 = vector.shape_cast %92 : vector<32xf32> to vector<1x32xf32>
    %cst_49 = arith.constant dense<0.000000e+00> : vector<1x32xf32>
    %94 = tpu.matmul %93, %83, %cst_49 {dimension_numbers = #tpu.dot_dimension_numbers<[1], [0], [0], [1], [0, 0, 1, 1], [], []>} : vector<1x32xf32>, vector<32x32xf32>, vector<1x32xf32> -> vector<1x32xf32>
    %cst_50 = arith.constant 5.000000e-02 : f32
    %95 = vector.broadcast %cst_50 : f32 to vector<1x32xf32>
    %96 = arith.mulf %94, %95 : vector<1x32xf32>
    %cst_51 = arith.constant 9.99999974E-6 : f32
    %97 = vector.broadcast %cst_51 : f32 to vector<1x32xf32>
    %98 = arith.addf %96, %97 : vector<1x32xf32>
    %99 = math.rsqrt %98 : vector<1x32xf32>
    %c0_52 = arith.constant 0 : index
    %c0_53 = arith.constant 0 : index
    %100 = vector.load %arg10[%c0_52, %c0_53] : memref<1x32xf32, #tpu.memory_space<vmem>>, vector<1x32xf32>
    %101 = arith.mulf %99, %100 : vector<1x32xf32>
    %102 = vector.broadcast %101 : vector<1x32xf32> to vector<10x32xf32>
    %103 = arith.mulf %90, %102 : vector<10x32xf32>
    %c0_54 = arith.constant 0 : index
    %c0_55 = arith.constant 0 : index
    %104 = vector.load %arg13[%c0_54, %c0_55] : memref<1x32xf32, #tpu.memory_space<vmem>>, vector<1x32xf32>
    %105 = vector.broadcast %104 : vector<1x32xf32> to vector<10x32xf32>
    %106 = arith.addf %103, %105 : vector<10x32xf32>
    %cst_56 = arith.constant 0.000000e+00 : f32
    %107 = vector.broadcast %cst_56 : f32 to vector<10x32xf32>
    %108 = arith.maximumf %106, %107 : vector<10x32xf32>
    %c0_57 = arith.constant 0 : index
    %c0_58 = arith.constant 0 : index
    %109 = vector.load %arg5[%c0_57, %c0_58] : memref<32x16xf32, #tpu.memory_space<vmem>>, vector<32x16xf32>
    %cst_59 = arith.constant dense<0.000000e+00> : vector<10x16xf32>
    %110 = tpu.matmul %108, %109, %cst_59 {dimension_numbers = #tpu.dot_dimension_numbers<[1], [0], [0], [1], [0, 0, 1, 1], [], []>} : vector<10x32xf32>, vector<32x16xf32>, vector<10x16xf32> -> vector<10x16xf32>
    %c0_60 = arith.constant 0 : index
    %c0_61 = arith.constant 0 : index
    %111 = vector.load %arg8[%c0_60, %c0_61] : memref<16x16xf32, #tpu.memory_space<vmem>>, vector<16x16xf32>
    %cst_62 = arith.constant dense<0.000000e+00> : vector<16xf32>
    %112 = vector.multi_reduction <add>, %110, %cst_62 [0] : vector<10x16xf32> to vector<16xf32>
    %113 = vector.shape_cast %112 : vector<16xf32> to vector<1x16xf32>
    %cst_63 = arith.constant dense<0.000000e+00> : vector<1x16xf32>
    %114 = tpu.matmul %113, %111, %cst_63 {dimension_numbers = #tpu.dot_dimension_numbers<[1], [0], [0], [1], [0, 0, 1, 1], [], []>} : vector<1x16xf32>, vector<16x16xf32>, vector<1x16xf32> -> vector<1x16xf32>
    %cst_64 = arith.constant 1.000000e-01 : f32
    %115 = vector.broadcast %cst_64 : f32 to vector<1x16xf32>
    %116 = arith.mulf %114, %115 : vector<1x16xf32>
    %117 = vector.broadcast %116 : vector<1x16xf32> to vector<10x16xf32>
    %118 = arith.subf %110, %117 : vector<10x16xf32>
    %119 = arith.mulf %118, %118 : vector<10x16xf32>
    %cst_65 = arith.constant dense<0.000000e+00> : vector<16xf32>
    %120 = vector.multi_reduction <add>, %119, %cst_65 [0] : vector<10x16xf32> to vector<16xf32>
    %121 = vector.shape_cast %120 : vector<16xf32> to vector<1x16xf32>
    %cst_66 = arith.constant dense<0.000000e+00> : vector<1x16xf32>
    %122 = tpu.matmul %121, %111, %cst_66 {dimension_numbers = #tpu.dot_dimension_numbers<[1], [0], [0], [1], [0, 0, 1, 1], [], []>} : vector<1x16xf32>, vector<16x16xf32>, vector<1x16xf32> -> vector<1x16xf32>
    %cst_67 = arith.constant 1.000000e-01 : f32
    %123 = vector.broadcast %cst_67 : f32 to vector<1x16xf32>
    %124 = arith.mulf %122, %123 : vector<1x16xf32>
    %cst_68 = arith.constant 9.99999974E-6 : f32
    %125 = vector.broadcast %cst_68 : f32 to vector<1x16xf32>
    %126 = arith.addf %124, %125 : vector<1x16xf32>
    %127 = math.rsqrt %126 : vector<1x16xf32>
    %c0_69 = arith.constant 0 : index
    %c0_70 = arith.constant 0 : index
    %128 = vector.load %arg11[%c0_69, %c0_70] : memref<1x16xf32, #tpu.memory_space<vmem>>, vector<1x16xf32>
    %129 = arith.mulf %127, %128 : vector<1x16xf32>
    %130 = vector.broadcast %129 : vector<1x16xf32> to vector<10x16xf32>
    %131 = arith.mulf %118, %130 : vector<10x16xf32>
    %c0_71 = arith.constant 0 : index
    %c0_72 = arith.constant 0 : index
    %132 = vector.load %arg14[%c0_71, %c0_72] : memref<1x16xf32, #tpu.memory_space<vmem>>, vector<1x16xf32>
    %133 = vector.broadcast %132 : vector<1x16xf32> to vector<10x16xf32>
    %134 = arith.addf %131, %133 : vector<10x16xf32>
    %cst_73 = arith.constant 0.000000e+00 : f32
    %135 = vector.broadcast %cst_73 : f32 to vector<10x16xf32>
    %136 = arith.maximumf %134, %135 : vector<10x16xf32>
    %c0_74 = arith.constant 0 : index
    %c0_75 = arith.constant 0 : index
    %137 = vector.load %arg15[%c0_74, %c0_75] : memref<16x16xf32, #tpu.memory_space<vmem>>, vector<16x16xf32>
    %cst_76 = arith.constant dense<0.000000e+00> : vector<10x16xf32>
    %138 = tpu.matmul %136, %137, %cst_76 {dimension_numbers = #tpu.dot_dimension_numbers<[1], [0], [0], [1], [0, 0, 1, 1], [], []>} : vector<10x16xf32>, vector<16x16xf32>, vector<10x16xf32> -> vector<10x16xf32>
    %c0_77 = arith.constant 0 : index
    %c0_78 = arith.constant 0 : index
    %139 = vector.load %arg16[%c0_77, %c0_78] : memref<1x16xf32, #tpu.memory_space<vmem>>, vector<1x16xf32>
    %140 = vector.broadcast %139 : vector<1x16xf32> to vector<10x16xf32>
    %141 = arith.addf %138, %140 : vector<10x16xf32>
    %c0_79 = arith.constant 0 : index
    %c0_80 = arith.constant 0 : index
    %142 = vector.load %arg17[%c0_79, %c0_80] : memref<10x16xf32, #tpu.memory_space<vmem>>, vector<10x16xf32>
    tpu.vector_store %arg17[%c0_79, %c0_80], %141 {strides = array<i32>} : memref<10x16xf32, #tpu.memory_space<vmem>>, vector<10x16xf32>,
    return
  }
  func.func @transform_0(%arg0: i32) -> i32 {
    %c0_i32 = arith.constant 0 : i32
    %c0_i32_0 = arith.constant 0 : i32
    return %c0_i32 : i32
  }
  func.func @transform_1(%arg0: i32) -> (i32, i32, i32) {
    %c0_i32 = arith.constant 0 : i32
    %c0_i32_0 = arith.constant 0 : i32
    %c0_i32_1 = arith.constant 0 : i32
    %c0_i32_2 = arith.constant 0 : i32
    return %c0_i32, %c0_i32_0, %c0_i32_1 : i32, i32, i32
  }
  func.func @transform_2(%arg0: i32) -> (i32, i32) {
    %c0_i32 = arith.constant 0 : i32
    %c0_i32_0 = arith.constant 0 : i32
    %c0_i32_1 = arith.constant 0 : i32
    return %c0_i32, %c0_i32_0 : i32, i32
  }
  func.func @transform_3(%arg0: i32) -> (i32, i32) {
    %c0_i32 = arith.constant 0 : i32
    %c0_i32_0 = arith.constant 0 : i32
    %c0_i32_1 = arith.constant 0 : i32
    return %c0_i32, %c0_i32_0 : i32, i32
  }
  func.func @transform_4(%arg0: i32) -> (i32, i32) {
    %c0_i32 = arith.constant 0 : i32
    %c0_i32_0 = arith.constant 0 : i32
    %c0_i32_1 = arith.constant 0 : i32
    return %c0_i32, %c0_i32_0 : i32, i32
  }
  func.func @transform_5(%arg0: i32) -> (i32, i32) {
    %c0_i32 = arith.constant 0 : i32
    %c0_i32_0 = arith.constant 0 : i32
    %c0_i32_1 = arith.constant 0 : i32
    return %c0_i32, %c0_i32_0 : i32, i32
  }
  func.func @transform_6(%arg0: i32) -> (i32, i32) {
    %c0_i32 = arith.constant 0 : i32
    %c0_i32_0 = arith.constant 0 : i32
    %c0_i32_1 = arith.constant 0 : i32
    return %c0_i32, %c0_i32_0 : i32, i32
  }
  func.func @transform_7(%arg0: i32) -> (i32, i32) {
    %c0_i32 = arith.constant 0 : i32
    %c0_i32_0 = arith.constant 0 : i32
    %c0_i32_1 = arith.constant 0 : i32
    return %c0_i32, %c0_i32_0 : i32, i32
  }
  func.func @transform_8(%arg0: i32) -> (i32, i32) {
    %c0_i32 = arith.constant 0 : i32
    %c0_i32_0 = arith.constant 0 : i32
    %c0_i32_1 = arith.constant 0 : i32
    return %c0_i32, %c0_i32_0 : i32, i32
  }
  func.func @transform_9(%arg0: i32) -> (i32, i32) {
    %c0_i32 = arith.constant 0 : i32
    %c0_i32_0 = arith.constant 0 : i32
    %c0_i32_1 = arith.constant 0 : i32
    return %c0_i32, %c0_i32_0 : i32, i32
  }
  func.func @transform_10(%arg0: i32) -> (i32, i32) {
    %c0_i32 = arith.constant 0 : i32
    %c0_i32_0 = arith.constant 0 : i32
    %c0_i32_1 = arith.constant 0 : i32
    return %c0_i32, %c0_i32_0 : i32, i32
  }
  func.func @transform_11(%arg0: i32) -> (i32, i32) {
    %c0_i32 = arith.constant 0 : i32
    %c0_i32_0 = arith.constant 0 : i32
    %c0_i32_1 = arith.constant 0 : i32
    return %c0_i32, %c0_i32_0 : i32, i32
  }
  func.func @transform_12(%arg0: i32) -> (i32, i32) {
    %c0_i32 = arith.constant 0 : i32
    %c0_i32_0 = arith.constant 0 : i32
    %c0_i32_1 = arith.constant 0 : i32
    return %c0_i32, %c0_i32_0 : i32, i32
  }
  func.func @transform_13(%arg0: i32) -> (i32, i32) {
    %c0_i32 = arith.constant 0 : i32
    %c0_i32_0 = arith.constant 0 : i32
    %c0_i32_1 = arith.constant 0 : i32
    return %c0_i32, %c0_i32_0 : i32, i32
  }
  func.func @transform_14(%arg0: i32) -> (i32, i32) {
    %c0_i32 = arith.constant 0 : i32
    %c0_i32_0 = arith.constant 0 : i32
    %c0_i32_1 = arith.constant 0 : i32
    return %c0_i32, %c0_i32_0 : i32, i32
  }
  func.func @transform_15(%arg0: i32) -> (i32, i32) {
    %c0_i32 = arith.constant 0 : i32
    %c0_i32_0 = arith.constant 0 : i32
    %c0_i32_1 = arith.constant 0 : i32
    return %c0_i32, %c0_i32_0 : i32, i32
  }
  func.func @transform_16(%arg0: i32) -> (i32, i32) {
    %c0_i32 = arith.constant 0 : i32
    %c0_i32_0 = arith.constant 0 : i32
    %c0_i32_1 = arith.constant 0 : i32
    return %c0_i32, %c0_i32_0 : i32, i32
  }
}

module attributes {stable_mosaic.version = 11 : i64} {
  func.func @kernel(%arg0: i32, %arg1: memref<5xi32, #tpu.memory_space<smem>>, %arg2: memref<2x64x32xf32, #tpu.memory_space<vmem>>, %arg3: memref<256x128xf32, #tpu.memory_space<vmem>>, %arg4: memref<128x64xf32, #tpu.memory_space<vmem>>, %arg5: memref<64x32xf32, #tpu.memory_space<vmem>>, %arg6: memref<128x128xf32, #tpu.memory_space<vmem>>, %arg7: memref<64x64xf32, #tpu.memory_space<vmem>>, %arg8: memref<32x32xf32, #tpu.memory_space<vmem>>, %arg9: memref<1x128xf32, #tpu.memory_space<vmem>>, %arg10: memref<1x64xf32, #tpu.memory_space<vmem>>, %arg11: memref<1x32xf32, #tpu.memory_space<vmem>>, %arg12: memref<1x128xf32, #tpu.memory_space<vmem>>, %arg13: memref<1x64xf32, #tpu.memory_space<vmem>>, %arg14: memref<1x32xf32, #tpu.memory_space<vmem>>, %arg15: memref<32x32xf32, #tpu.memory_space<vmem>>, %arg16: memref<1x32xf32, #tpu.memory_space<vmem>>, %arg17: memref<10x32xf32, #tpu.memory_space<vmem>>) attributes {dimension_semantics = [#tpu.dimension_semantics<arbitrary>], iteration_bounds = array<i64: 1>, scalar_prefetch = 0 : i64, scratch_operands = 0 : i64, tpu.core_type = #tpu.core_type<tc>, window_params = [{transform_indices = @transform_0, window_bounds = array<i64: 5>}, {pipeline_mode = #tpu.pipeline_mode<synchronous>, transform_indices = @transform_1, window_bounds = array<i64: 2, 64, 32>}, {pipeline_mode = #tpu.pipeline_mode<synchronous>, transform_indices = @transform_2, window_bounds = array<i64: 256, 128>}, {pipeline_mode = #tpu.pipeline_mode<synchronous>, transform_indices = @transform_3, window_bounds = array<i64: 128, 64>}, {pipeline_mode = #tpu.pipeline_mode<synchronous>, transform_indices = @transform_4, window_bounds = array<i64: 64, 32>}, {pipeline_mode = #tpu.pipeline_mode<synchronous>, transform_indices = @transform_5, window_bounds = array<i64: 128, 128>}, {pipeline_mode = #tpu.pipeline_mode<synchronous>, transform_indices = @transform_6, window_bounds = array<i64: 64, 64>}, {pipeline_mode = #tpu.pipeline_mode<synchronous>, transform_indices = @transform_7, window_bounds = array<i64: 32, 32>}, {pipeline_mode = #tpu.pipeline_mode<synchronous>, transform_indices = @transform_8, window_bounds = array<i64: 1, 128>}, {pipeline_mode = #tpu.pipeline_mode<synchronous>, transform_indices = @transform_9, window_bounds = array<i64: 1, 64>}, {pipeline_mode = #tpu.pipeline_mode<synchronous>, transform_indices = @transform_10, window_bounds = array<i64: 1, 32>}, {pipeline_mode = #tpu.pipeline_mode<synchronous>, transform_indices = @transform_11, window_bounds = array<i64: 1, 128>}, {pipeline_mode = #tpu.pipeline_mode<synchronous>, transform_indices = @transform_12, window_bounds = array<i64: 1, 64>}, {pipeline_mode = #tpu.pipeline_mode<synchronous>, transform_indices = @transform_13, window_bounds = array<i64: 1, 32>}, {pipeline_mode = #tpu.pipeline_mode<synchronous>, transform_indices = @transform_14, window_bounds = array<i64: 32, 32>}, {pipeline_mode = #tpu.pipeline_mode<synchronous>, transform_indices = @transform_15, window_bounds = array<i64: 1, 32>}, {pipeline_mode = #tpu.pipeline_mode<synchronous>, transform_indices = @transform_16, window_bounds = array<i64: 10, 32>}]} {
    %c0 = arith.constant 0 : index
    %0 = memref.load %arg1[%c0] : memref<5xi32, #tpu.memory_space<smem>>
    %c0_0 = arith.constant 0 : index
    %1 = arith.index_cast %0 : i32 to index
    %c0_1 = arith.constant 0 : index
    %2 = vector.load %arg2[%c0_0, %1, %c0_1] : memref<2x64x32xf32, #tpu.memory_space<vmem>>, vector<2x8x32xf32>
    %c1 = arith.constant 1 : index
    %3 = memref.load %arg1[%c1] : memref<5xi32, #tpu.memory_space<smem>>
    %c0_2 = arith.constant 0 : index
    %4 = arith.index_cast %3 : i32 to index
    %c0_3 = arith.constant 0 : index
    %5 = vector.load %arg2[%c0_2, %4, %c0_3] : memref<2x64x32xf32, #tpu.memory_space<vmem>>, vector<2x8x32xf32>
    %c2 = arith.constant 2 : index
    %6 = memref.load %arg1[%c2] : memref<5xi32, #tpu.memory_space<smem>>
    %c0_4 = arith.constant 0 : index
    %7 = arith.index_cast %6 : i32 to index
    %c0_5 = arith.constant 0 : index
    %8 = vector.load %arg2[%c0_4, %7, %c0_5] : memref<2x64x32xf32, #tpu.memory_space<vmem>>, vector<2x8x32xf32>
    %c3 = arith.constant 3 : index
    %9 = memref.load %arg1[%c3] : memref<5xi32, #tpu.memory_space<smem>>
    %c0_6 = arith.constant 0 : index
    %10 = arith.index_cast %9 : i32 to index
    %c0_7 = arith.constant 0 : index
    %11 = vector.load %arg2[%c0_6, %10, %c0_7] : memref<2x64x32xf32, #tpu.memory_space<vmem>>, vector<2x8x32xf32>
    %c4 = arith.constant 4 : index
    %12 = memref.load %arg1[%c4] : memref<5xi32, #tpu.memory_space<smem>>
    %c0_8 = arith.constant 0 : index
    %13 = arith.index_cast %12 : i32 to index
    %c0_9 = arith.constant 0 : index
    %14 = vector.load %arg2[%c0_8, %13, %c0_9] : memref<2x64x32xf32, #tpu.memory_space<vmem>>, vector<2x8x32xf32>
    %15 = tpu.concatenate %2, %5, %8, %11, %14 in 0 : vector<2x8x32xf32>, vector<2x8x32xf32>, vector<2x8x32xf32>, vector<2x8x32xf32>, vector<2x8x32xf32> -> vector<10x8x32xf32>
    %16 = vector.extract_strided_slice %15 {offsets = [0, 0, 0], sizes = [10, 1, 32], strides = [1, 1, 1]} : vector<10x8x32xf32> to vector<10x1x32xf32>
    %17 = vector.shape_cast %16 : vector<10x1x32xf32> to vector<10x32xf32>
    %c0_10 = arith.constant 0 : index
    %c0_11 = arith.constant 0 : index
    %18 = vector.load %arg3[%c0_10, %c0_11] : memref<256x128xf32, #tpu.memory_space<vmem>>, vector<32x128xf32>
    %cst = arith.constant dense<0.000000e+00> : vector<10x128xf32>
    %19 = tpu.matmul %17, %18, %cst {dimension_numbers = #tpu.dot_dimension_numbers<[1], [0], [0], [1], [0, 0, 1, 1], [], []>} : vector<10x32xf32>, vector<32x128xf32>, vector<10x128xf32> -> vector<10x128xf32>
    %20 = vector.extract_strided_slice %15 {offsets = [0, 1, 0], sizes = [10, 1, 32], strides = [1, 1, 1]} : vector<10x8x32xf32> to vector<10x1x32xf32>
    %21 = vector.shape_cast %20 : vector<10x1x32xf32> to vector<10x32xf32>
    %c32 = arith.constant 32 : index
    %c0_12 = arith.constant 0 : index
    %22 = vector.load %arg3[%c32, %c0_12] : memref<256x128xf32, #tpu.memory_space<vmem>>, vector<32x128xf32>
    %cst_13 = arith.constant dense<0.000000e+00> : vector<10x128xf32>
    %23 = tpu.matmul %21, %22, %cst_13 {dimension_numbers = #tpu.dot_dimension_numbers<[1], [0], [0], [1], [0, 0, 1, 1], [], []>} : vector<10x32xf32>, vector<32x128xf32>, vector<10x128xf32> -> vector<10x128xf32>
    %24 = vector.extract_strided_slice %15 {offsets = [0, 2, 0], sizes = [10, 1, 32], strides = [1, 1, 1]} : vector<10x8x32xf32> to vector<10x1x32xf32>
    %25 = vector.shape_cast %24 : vector<10x1x32xf32> to vector<10x32xf32>
    %c64 = arith.constant 64 : index
    %c0_14 = arith.constant 0 : index
    %26 = vector.load %arg3[%c64, %c0_14] : memref<256x128xf32, #tpu.memory_space<vmem>>, vector<32x128xf32>
    %cst_15 = arith.constant dense<0.000000e+00> : vector<10x128xf32>
    %27 = tpu.matmul %25, %26, %cst_15 {dimension_numbers = #tpu.dot_dimension_numbers<[1], [0], [0], [1], [0, 0, 1, 1], [], []>} : vector<10x32xf32>, vector<32x128xf32>, vector<10x128xf32> -> vector<10x128xf32>
    %28 = vector.extract_strided_slice %15 {offsets = [0, 3, 0], sizes = [10, 1, 32], strides = [1, 1, 1]} : vector<10x8x32xf32> to vector<10x1x32xf32>
    %29 = vector.shape_cast %28 : vector<10x1x32xf32> to vector<10x32xf32>
    %c96 = arith.constant 96 : index
    %c0_16 = arith.constant 0 : index
    %30 = vector.load %arg3[%c96, %c0_16] : memref<256x128xf32, #tpu.memory_space<vmem>>, vector<32x128xf32>
    %cst_17 = arith.constant dense<0.000000e+00> : vector<10x128xf32>
    %31 = tpu.matmul %29, %30, %cst_17 {dimension_numbers = #tpu.dot_dimension_numbers<[1], [0], [0], [1], [0, 0, 1, 1], [], []>} : vector<10x32xf32>, vector<32x128xf32>, vector<10x128xf32> -> vector<10x128xf32>
    %32 = vector.extract_strided_slice %15 {offsets = [0, 4, 0], sizes = [10, 1, 32], strides = [1, 1, 1]} : vector<10x8x32xf32> to vector<10x1x32xf32>
    %33 = vector.shape_cast %32 : vector<10x1x32xf32> to vector<10x32xf32>
    %c128 = arith.constant 128 : index
    %c0_18 = arith.constant 0 : index
    %34 = vector.load %arg3[%c128, %c0_18] : memref<256x128xf32, #tpu.memory_space<vmem>>, vector<32x128xf32>
    %cst_19 = arith.constant dense<0.000000e+00> : vector<10x128xf32>
    %35 = tpu.matmul %33, %34, %cst_19 {dimension_numbers = #tpu.dot_dimension_numbers<[1], [0], [0], [1], [0, 0, 1, 1], [], []>} : vector<10x32xf32>, vector<32x128xf32>, vector<10x128xf32> -> vector<10x128xf32>
    %36 = vector.extract_strided_slice %15 {offsets = [0, 5, 0], sizes = [10, 1, 32], strides = [1, 1, 1]} : vector<10x8x32xf32> to vector<10x1x32xf32>
    %37 = vector.shape_cast %36 : vector<10x1x32xf32> to vector<10x32xf32>
    %c160 = arith.constant 160 : index
    %c0_20 = arith.constant 0 : index
    %38 = vector.load %arg3[%c160, %c0_20] : memref<256x128xf32, #tpu.memory_space<vmem>>, vector<32x128xf32>
    %cst_21 = arith.constant dense<0.000000e+00> : vector<10x128xf32>
    %39 = tpu.matmul %37, %38, %cst_21 {dimension_numbers = #tpu.dot_dimension_numbers<[1], [0], [0], [1], [0, 0, 1, 1], [], []>} : vector<10x32xf32>, vector<32x128xf32>, vector<10x128xf32> -> vector<10x128xf32>
    %40 = vector.extract_strided_slice %15 {offsets = [0, 6, 0], sizes = [10, 1, 32], strides = [1, 1, 1]} : vector<10x8x32xf32> to vector<10x1x32xf32>
    %41 = vector.shape_cast %40 : vector<10x1x32xf32> to vector<10x32xf32>
    %c192 = arith.constant 192 : index
    %c0_22 = arith.constant 0 : index
    %42 = vector.load %arg3[%c192, %c0_22] : memref<256x128xf32, #tpu.memory_space<vmem>>, vector<32x128xf32>
    %cst_23 = arith.constant dense<0.000000e+00> : vector<10x128xf32>
    %43 = tpu.matmul %41, %42, %cst_23 {dimension_numbers = #tpu.dot_dimension_numbers<[1], [0], [0], [1], [0, 0, 1, 1], [], []>} : vector<10x32xf32>, vector<32x128xf32>, vector<10x128xf32> -> vector<10x128xf32>
    %44 = vector.extract_strided_slice %15 {offsets = [0, 7, 0], sizes = [10, 1, 32], strides = [1, 1, 1]} : vector<10x8x32xf32> to vector<10x1x32xf32>
    %45 = vector.shape_cast %44 : vector<10x1x32xf32> to vector<10x32xf32>
    %c224 = arith.constant 224 : index
    %c0_24 = arith.constant 0 : index
    %46 = vector.load %arg3[%c224, %c0_24] : memref<256x128xf32, #tpu.memory_space<vmem>>, vector<32x128xf32>
    %cst_25 = arith.constant dense<0.000000e+00> : vector<10x128xf32>
    %47 = tpu.matmul %45, %46, %cst_25 {dimension_numbers = #tpu.dot_dimension_numbers<[1], [0], [0], [1], [0, 0, 1, 1], [], []>} : vector<10x32xf32>, vector<32x128xf32>, vector<10x128xf32> -> vector<10x128xf32>
    %48 = arith.addf %19, %23 : vector<10x128xf32>
    %49 = arith.addf %48, %27 : vector<10x128xf32>
    %50 = arith.addf %49, %31 : vector<10x128xf32>
    %51 = arith.addf %50, %35 : vector<10x128xf32>
    %52 = arith.addf %51, %39 : vector<10x128xf32>
    %53 = arith.addf %52, %43 : vector<10x128xf32>
    %54 = arith.addf %53, %47 : vector<10x128xf32>
    %c0_26 = arith.constant 0 : index
    %c0_27 = arith.constant 0 : index
    %55 = vector.load %arg6[%c0_26, %c0_27] : memref<128x128xf32, #tpu.memory_space<vmem>>, vector<128x128xf32>
    %cst_28 = arith.constant dense<0.000000e+00> : vector<128xf32>
    %56 = vector.multi_reduction <add>, %54, %cst_28 [0] : vector<10x128xf32> to vector<128xf32>
    %57 = vector.shape_cast %56 : vector<128xf32> to vector<1x128xf32>
    %cst_29 = arith.constant dense<0.000000e+00> : vector<1x128xf32>
    %58 = tpu.matmul %57, %55, %cst_29 {dimension_numbers = #tpu.dot_dimension_numbers<[1], [0], [0], [1], [0, 0, 1, 1], [], []>} : vector<1x128xf32>, vector<128x128xf32>, vector<1x128xf32> -> vector<1x128xf32>
    %cst_30 = arith.constant 2.500000e-02 : f32
    %59 = vector.broadcast %cst_30 : f32 to vector<1x128xf32>
    %60 = arith.mulf %58, %59 : vector<1x128xf32>
    %61 = vector.broadcast %60 : vector<1x128xf32> to vector<10x128xf32>
    %62 = arith.subf %54, %61 : vector<10x128xf32>
    %63 = arith.mulf %62, %62 : vector<10x128xf32>
    %cst_31 = arith.constant dense<0.000000e+00> : vector<128xf32>
    %64 = vector.multi_reduction <add>, %63, %cst_31 [0] : vector<10x128xf32> to vector<128xf32>
    %65 = vector.shape_cast %64 : vector<128xf32> to vector<1x128xf32>
    %cst_32 = arith.constant dense<0.000000e+00> : vector<1x128xf32>
    %66 = tpu.matmul %65, %55, %cst_32 {dimension_numbers = #tpu.dot_dimension_numbers<[1], [0], [0], [1], [0, 0, 1, 1], [], []>} : vector<1x128xf32>, vector<128x128xf32>, vector<1x128xf32> -> vector<1x128xf32>
    %cst_33 = arith.constant 2.500000e-02 : f32
    %67 = vector.broadcast %cst_33 : f32 to vector<1x128xf32>
    %68 = arith.mulf %66, %67 : vector<1x128xf32>
    %cst_34 = arith.constant 9.99999974E-6 : f32
    %69 = vector.broadcast %cst_34 : f32 to vector<1x128xf32>
    %70 = arith.addf %68, %69 : vector<1x128xf32>
    %71 = math.rsqrt %70 : vector<1x128xf32>
    %c0_35 = arith.constant 0 : index
    %c0_36 = arith.constant 0 : index
    %72 = vector.load %arg9[%c0_35, %c0_36] : memref<1x128xf32, #tpu.memory_space<vmem>>, vector<1x128xf32>
    %73 = arith.mulf %71, %72 : vector<1x128xf32>
    %74 = vector.broadcast %73 : vector<1x128xf32> to vector<10x128xf32>
    %75 = arith.mulf %62, %74 : vector<10x128xf32>
    %c0_37 = arith.constant 0 : index
    %c0_38 = arith.constant 0 : index
    %76 = vector.load %arg12[%c0_37, %c0_38] : memref<1x128xf32, #tpu.memory_space<vmem>>, vector<1x128xf32>
    %77 = vector.broadcast %76 : vector<1x128xf32> to vector<10x128xf32>
    %78 = arith.addf %75, %77 : vector<10x128xf32>
    %cst_39 = arith.constant 0.000000e+00 : f32
    %79 = vector.broadcast %cst_39 : f32 to vector<10x128xf32>
    %80 = arith.maximumf %78, %79 : vector<10x128xf32>
    %c0_40 = arith.constant 0 : index
    %c0_41 = arith.constant 0 : index
    %81 = vector.load %arg4[%c0_40, %c0_41] : memref<128x64xf32, #tpu.memory_space<vmem>>, vector<128x64xf32>
    %cst_42 = arith.constant dense<0.000000e+00> : vector<10x64xf32>
    %82 = tpu.matmul %80, %81, %cst_42 {dimension_numbers = #tpu.dot_dimension_numbers<[1], [0], [0], [1], [0, 0, 1, 1], [], []>} : vector<10x128xf32>, vector<128x64xf32>, vector<10x64xf32> -> vector<10x64xf32>
    %c0_43 = arith.constant 0 : index
    %c0_44 = arith.constant 0 : index
    %83 = vector.load %arg7[%c0_43, %c0_44] : memref<64x64xf32, #tpu.memory_space<vmem>>, vector<64x64xf32>
    %cst_45 = arith.constant dense<0.000000e+00> : vector<64xf32>
    %84 = vector.multi_reduction <add>, %82, %cst_45 [0] : vector<10x64xf32> to vector<64xf32>
    %85 = vector.shape_cast %84 : vector<64xf32> to vector<1x64xf32>
    %cst_46 = arith.constant dense<0.000000e+00> : vector<1x64xf32>
    %86 = tpu.matmul %85, %83, %cst_46 {dimension_numbers = #tpu.dot_dimension_numbers<[1], [0], [0], [1], [0, 0, 1, 1], [], []>} : vector<1x64xf32>, vector<64x64xf32>, vector<1x64xf32> -> vector<1x64xf32>
    %cst_47 = arith.constant 5.000000e-02 : f32
    %87 = vector.broadcast %cst_47 : f32 to vector<1x64xf32>
    %88 = arith.mulf %86, %87 : vector<1x64xf32>
    %89 = vector.broadcast %88 : vector<1x64xf32> to vector<10x64xf32>
    %90 = arith.subf %82, %89 : vector<10x64xf32>
    %91 = arith.mulf %90, %90 : vector<10x64xf32>
    %cst_48 = arith.constant dense<0.000000e+00> : vector<64xf32>
    %92 = vector.multi_reduction <add>, %91, %cst_48 [0] : vector<10x64xf32> to vector<64xf32>
    %93 = vector.shape_cast %92 : vector<64xf32> to vector<1x64xf32>
    %cst_49 = arith.constant dense<0.000000e+00> : vector<1x64xf32>
    %94 = tpu.matmul %93, %83, %cst_49 {dimension_numbers = #tpu.dot_dimension_numbers<[1], [0], [0], [1], [0, 0, 1, 1], [], []>} : vector<1x64xf32>, vector<64x64xf32>, vector<1x64xf32> -> vector<1x64xf32>
    %cst_50 = arith.constant 5.000000e-02 : f32
    %95 = vector.broadcast %cst_50 : f32 to vector<1x64xf32>
    %96 = arith.mulf %94, %95 : vector<1x64xf32>
    %cst_51 = arith.constant 9.99999974E-6 : f32
    %97 = vector.broadcast %cst_51 : f32 to vector<1x64xf32>
    %98 = arith.addf %96, %97 : vector<1x64xf32>
    %99 = math.rsqrt %98 : vector<1x64xf32>
    %c0_52 = arith.constant 0 : index
    %c0_53 = arith.constant 0 : index
    %100 = vector.load %arg10[%c0_52, %c0_53] : memref<1x64xf32, #tpu.memory_space<vmem>>, vector<1x64xf32>
    %101 = arith.mulf %99, %100 : vector<1x64xf32>
    %102 = vector.broadcast %101 : vector<1x64xf32> to vector<10x64xf32>
    %103 = arith.mulf %90, %102 : vector<10x64xf32>
    %c0_54 = arith.constant 0 : index
    %c0_55 = arith.constant 0 : index
    %104 = vector.load %arg13[%c0_54, %c0_55] : memref<1x64xf32, #tpu.memory_space<vmem>>, vector<1x64xf32>
    %105 = vector.broadcast %104 : vector<1x64xf32> to vector<10x64xf32>
    %106 = arith.addf %103, %105 : vector<10x64xf32>
    %cst_56 = arith.constant 0.000000e+00 : f32
    %107 = vector.broadcast %cst_56 : f32 to vector<10x64xf32>
    %108 = arith.maximumf %106, %107 : vector<10x64xf32>
    %c0_57 = arith.constant 0 : index
    %c0_58 = arith.constant 0 : index
    %109 = vector.load %arg5[%c0_57, %c0_58] : memref<64x32xf32, #tpu.memory_space<vmem>>, vector<64x32xf32>
    %cst_59 = arith.constant dense<0.000000e+00> : vector<10x32xf32>
    %110 = tpu.matmul %108, %109, %cst_59 {dimension_numbers = #tpu.dot_dimension_numbers<[1], [0], [0], [1], [0, 0, 1, 1], [], []>} : vector<10x64xf32>, vector<64x32xf32>, vector<10x32xf32> -> vector<10x32xf32>
    %c0_60 = arith.constant 0 : index
    %c0_61 = arith.constant 0 : index
    %111 = vector.load %arg8[%c0_60, %c0_61] : memref<32x32xf32, #tpu.memory_space<vmem>>, vector<32x32xf32>
    %cst_62 = arith.constant dense<0.000000e+00> : vector<32xf32>
    %112 = vector.multi_reduction <add>, %110, %cst_62 [0] : vector<10x32xf32> to vector<32xf32>
    %113 = vector.shape_cast %112 : vector<32xf32> to vector<1x32xf32>
    %cst_63 = arith.constant dense<0.000000e+00> : vector<1x32xf32>
    %114 = tpu.matmul %113, %111, %cst_63 {dimension_numbers = #tpu.dot_dimension_numbers<[1], [0], [0], [1], [0, 0, 1, 1], [], []>} : vector<1x32xf32>, vector<32x32xf32>, vector<1x32xf32> -> vector<1x32xf32>
    %cst_64 = arith.constant 1.000000e-01 : f32
    %115 = vector.broadcast %cst_64 : f32 to vector<1x32xf32>
    %116 = arith.mulf %114, %115 : vector<1x32xf32>
    %117 = vector.broadcast %116 : vector<1x32xf32> to vector<10x32xf32>
    %118 = arith.subf %110, %117 : vector<10x32xf32>
    %119 = arith.mulf %118, %118 : vector<10x32xf32>
    %cst_65 = arith.constant dense<0.000000e+00> : vector<32xf32>
    %120 = vector.multi_reduction <add>, %119, %cst_65 [0] : vector<10x32xf32> to vector<32xf32>
    %121 = vector.shape_cast %120 : vector<32xf32> to vector<1x32xf32>
    %cst_66 = arith.constant dense<0.000000e+00> : vector<1x32xf32>
    %122 = tpu.matmul %121, %111, %cst_66 {dimension_numbers = #tpu.dot_dimension_numbers<[1], [0], [0], [1], [0, 0, 1, 1], [], []>} : vector<1x32xf32>, vector<32x32xf32>, vector<1x32xf32> -> vector<1x32xf32>
    %cst_67 = arith.constant 1.000000e-01 : f32
    %123 = vector.broadcast %cst_67 : f32 to vector<1x32xf32>
    %124 = arith.mulf %122, %123 : vector<1x32xf32>
    %cst_68 = arith.constant 9.99999974E-6 : f32
    %125 = vector.broadcast %cst_68 : f32 to vector<1x32xf32>
    %126 = arith.addf %124, %125 : vector<1x32xf32>
    %127 = math.rsqrt %126 : vector<1x32xf32>
    %c0_69 = arith.constant 0 : index
    %c0_70 = arith.constant 0 : index
    %128 = vector.load %arg11[%c0_69, %c0_70] : memref<1x32xf32, #tpu.memory_space<vmem>>, vector<1x32xf32>
    %129 = arith.mulf %127, %128 : vector<1x32xf32>
    %130 = vector.broadcast %129 : vector<1x32xf32> to vector<10x32xf32>
    %131 = arith.mulf %118, %130 : vector<10x32xf32>
    %c0_71 = arith.constant 0 : index
    %c0_72 = arith.constant 0 : index
    %132 = vector.load %arg14[%c0_71, %c0_72] : memref<1x32xf32, #tpu.memory_space<vmem>>, vector<1x32xf32>
    %133 = vector.broadcast %132 : vector<1x32xf32> to vector<10x32xf32>
    %134 = arith.addf %131, %133 : vector<10x32xf32>
    %cst_73 = arith.constant 0.000000e+00 : f32
    %135 = vector.broadcast %cst_73 : f32 to vector<10x32xf32>
    %136 = arith.maximumf %134, %135 : vector<10x32xf32>
    %c0_74 = arith.constant 0 : index
    %c0_75 = arith.constant 0 : index
    %137 = vector.load %arg15[%c0_74, %c0_75] : memref<32x32xf32, #tpu.memory_space<vmem>>, vector<32x32xf32>
    %cst_76 = arith.constant dense<0.000000e+00> : vector<10x32xf32>
    %138 = tpu.matmul %136, %137, %cst_76 {dimension_numbers = #tpu.dot_dimension_numbers<[1], [0], [0], [1], [0, 0, 1, 1], [], []>} : vector<10x32xf32>, vector<32x32xf32>, vector<10x32xf32> -> vector<10x32xf32>
    %c0_77 = arith.constant 0 : index
    %c0_78 = arith.constant 0 : index
    %139 = vector.load %arg16[%c0_77, %c0_78] : memref<1x32xf32, #tpu.memory_space<vmem>>, vector<1x32xf32>
    %140 = vector.broadcast %139 : vector<1x32xf32> to vector<10x32xf32>
    %141 = arith.addf %138, %140 : vector<10x32xf32>
    %c0_79 = arith.constant 0 : index
    %c0_80 = arith.constant 0 : index
    %142 = vector.load %arg17[%c0_79, %c0_80] : memref<10x32xf32, #tpu.memory_space<vmem>>, vector<10x32xf32>
    tpu.vector_store %arg17[%c0_79, %c0_80], %141 {strides = array<i32>} : memref<10x32xf32, #tpu.memory_space<vmem>>, vector<10x32xf32>,
    return
  }
  func.func @transform_0(%arg0: i32) -> i32 {
    %c0_i32 = arith.constant 0 : i32
    %c0_i32_0 = arith.constant 0 : i32
    return %c0_i32 : i32
  }
  func.func @transform_1(%arg0: i32) -> (i32, i32, i32) {
    %c0_i32 = arith.constant 0 : i32
    %c0_i32_0 = arith.constant 0 : i32
    %c0_i32_1 = arith.constant 0 : i32
    %c0_i32_2 = arith.constant 0 : i32
    return %c0_i32, %c0_i32_0, %c0_i32_1 : i32, i32, i32
  }
  func.func @transform_2(%arg0: i32) -> (i32, i32) {
    %c0_i32 = arith.constant 0 : i32
    %c0_i32_0 = arith.constant 0 : i32
    %c0_i32_1 = arith.constant 0 : i32
    return %c0_i32, %c0_i32_0 : i32, i32
  }
  func.func @transform_3(%arg0: i32) -> (i32, i32) {
    %c0_i32 = arith.constant 0 : i32
    %c0_i32_0 = arith.constant 0 : i32
    %c0_i32_1 = arith.constant 0 : i32
    return %c0_i32, %c0_i32_0 : i32, i32
  }
  func.func @transform_4(%arg0: i32) -> (i32, i32) {
    %c0_i32 = arith.constant 0 : i32
    %c0_i32_0 = arith.constant 0 : i32
    %c0_i32_1 = arith.constant 0 : i32
    return %c0_i32, %c0_i32_0 : i32, i32
  }
  func.func @transform_5(%arg0: i32) -> (i32, i32) {
    %c0_i32 = arith.constant 0 : i32
    %c0_i32_0 = arith.constant 0 : i32
    %c0_i32_1 = arith.constant 0 : i32
    return %c0_i32, %c0_i32_0 : i32, i32
  }
  func.func @transform_6(%arg0: i32) -> (i32, i32) {
    %c0_i32 = arith.constant 0 : i32
    %c0_i32_0 = arith.constant 0 : i32
    %c0_i32_1 = arith.constant 0 : i32
    return %c0_i32, %c0_i32_0 : i32, i32
  }
  func.func @transform_7(%arg0: i32) -> (i32, i32) {
    %c0_i32 = arith.constant 0 : i32
    %c0_i32_0 = arith.constant 0 : i32
    %c0_i32_1 = arith.constant 0 : i32
    return %c0_i32, %c0_i32_0 : i32, i32
  }
  func.func @transform_8(%arg0: i32) -> (i32, i32) {
    %c0_i32 = arith.constant 0 : i32
    %c0_i32_0 = arith.constant 0 : i32
    %c0_i32_1 = arith.constant 0 : i32
    return %c0_i32, %c0_i32_0 : i32, i32
  }
  func.func @transform_9(%arg0: i32) -> (i32, i32) {
    %c0_i32 = arith.constant 0 : i32
    %c0_i32_0 = arith.constant 0 : i32
    %c0_i32_1 = arith.constant 0 : i32
    return %c0_i32, %c0_i32_0 : i32, i32
  }
  func.func @transform_10(%arg0: i32) -> (i32, i32) {
    %c0_i32 = arith.constant 0 : i32
    %c0_i32_0 = arith.constant 0 : i32
    %c0_i32_1 = arith.constant 0 : i32
    return %c0_i32, %c0_i32_0 : i32, i32
  }
  func.func @transform_11(%arg0: i32) -> (i32, i32) {
    %c0_i32 = arith.constant 0 : i32
    %c0_i32_0 = arith.constant 0 : i32
    %c0_i32_1 = arith.constant 0 : i32
    return %c0_i32, %c0_i32_0 : i32, i32
  }
  func.func @transform_12(%arg0: i32) -> (i32, i32) {
    %c0_i32 = arith.constant 0 : i32
    %c0_i32_0 = arith.constant 0 : i32
    %c0_i32_1 = arith.constant 0 : i32
    return %c0_i32, %c0_i32_0 : i32, i32
  }
  func.func @transform_13(%arg0: i32) -> (i32, i32) {
    %c0_i32 = arith.constant 0 : i32
    %c0_i32_0 = arith.constant 0 : i32
    %c0_i32_1 = arith.constant 0 : i32
    return %c0_i32, %c0_i32_0 : i32, i32
  }
  func.func @transform_14(%arg0: i32) -> (i32, i32) {
    %c0_i32 = arith.constant 0 : i32
    %c0_i32_0 = arith.constant 0 : i32
    %c0_i32_1 = arith.constant 0 : i32
    return %c0_i32, %c0_i32_0 : i32, i32
  }
  func.func @transform_15(%arg0: i32) -> (i32, i32) {
    %c0_i32 = arith.constant 0 : i32
    %c0_i32_0 = arith.constant 0 : i32
    %c0_i32_1 = arith.constant 0 : i32
    return %c0_i32, %c0_i32_0 : i32, i32
  }
  func.func @transform_16(%arg0: i32) -> (i32, i32) {
    %c0_i32 = arith.constant 0 : i32
    %c0_i32_0 = arith.constant 0 : i32
    %c0_i32_1 = arith.constant 0 : i32
    return %c0_i32, %c0_i32_0 : i32, i32
  }
}

</mosaic_0001>

<llo_original>
// kernel: temporal_patches_forward.3
$region0: #{temporal_patches_forward.3}
  #allocation0 [shape = 'u32[]', space=smem, size = 0x4, offset = 0x4, fixed_abs, tag = 'smem constant byte address 0x4 - core index']
  #allocation1 [shape = 'u32[72,128]{1,0:T(1,128)}', space=vmem, size = 0x9000, scoped, tag = 'internal scratch']
  %s0 = inlined_call_operand.vmem [shape: s32[5], index: 0, kind: input, shape index: {}]
  %s1 = inlined_call_operand.vmem [shape: f32[2,48,16], index: 1, kind: input, shape index: {}]
  %s2 = inlined_call_operand.vmem [shape: f32[128,64], index: 2, kind: input, shape index: {}]
  %s3 = inlined_call_operand.vmem [shape: f32[64,32], index: 3, kind: input, shape index: {}]
  %s4 = inlined_call_operand.vmem [shape: f32[32,16], index: 4, kind: input, shape index: {}]
  %s5 = inlined_call_operand.vmem [shape: f32[64,64], index: 5, kind: input, shape index: {}]
  %s6 = inlined_call_operand.vmem [shape: f32[32,32], index: 6, kind: input, shape index: {}]
  %s7 = inlined_call_operand.vmem [shape: f32[16,16], index: 7, kind: input, shape index: {}]
  %s8 = inlined_call_operand.vmem [shape: f32[1,64], index: 8, kind: input, shape index: {}]
  %s9 = inlined_call_operand.vmem [shape: f32[1,32], index: 9, kind: input, shape index: {}]
  %s10 = inlined_call_operand.vmem [shape: f32[1,16], index: 10, kind: input, shape index: {}]
  %s11 = inlined_call_operand.vmem [shape: f32[1,64], index: 11, kind: input, shape index: {}]
  %s12 = inlined_call_operand.vmem [shape: f32[1,32], index: 12, kind: input, shape index: {}]
  %s13 = inlined_call_operand.vmem [shape: f32[1,16], index: 13, kind: input, shape index: {}]
  %s14 = inlined_call_operand.vmem [shape: f32[16,16], index: 14, kind: input, shape index: {}]
  %s15 = inlined_call_operand.vmem [shape: f32[1,16], index: 15, kind: input, shape index: {}]
  %s16 = inlined_call_operand.vmem [shape: f32[10,16], index: 16, kind: output, shape index: {}]
  %s17 = sld [smem:[#allocation0]]
  $region78: #{temporal_patches_forward.3} parent=0
    _
  %s19 = ssub.s32 1, %s17
  %s20 = scalar_select 0, %s19, %s17
  $region1: #{temporal_patches_forward.3} parent=0
    #allocation2 [shape = 'u8[512]{0}', space=smem, size = 0x200, scoped, tag = 'input window, operand 0, single buffered']
    #allocation3 [shape = 's32[1]{0}', space=sflag, size = 0x4, scoped, tag = 'scoped memory for temporal_patches_forward.3']
    %21 = vsyncpa [#allocation3], 0
    // Predicated region
    $region2: #{temporal_patches_forward.3} parent=1 // pred_check
      _
    $region3: #{temporal_patches_forward.3} parent=1 // pred_check_branch
      %23 = sbr.rel (0) target = $region5
    $region4: #{temporal_patches_forward.3} parent=1 // pred_region
      %25 = vsyncadd [#allocation3], 0
      %s27 = sshll.u32 %s0, 4
      %s28 = int_to_ptr.vmem [resolvable:$true] %s27
      %30 = dma.vmem_to_smem %s28, 16, [#allocation2], [#allocation3]
    $region5: #{temporal_patches_forward.3} parent=1 // pred_fallthru
      _
    // Predicated region
    $region6: #{temporal_patches_forward.3} parent=1 // pred_check
      _
    $region7: #{temporal_patches_forward.3} parent=1 // pred_check_branch
      %32 = sbr.rel (0) target = $region9
    $region8: #{temporal_patches_forward.3} parent=1 // pred_region
      _
    $region9: #{temporal_patches_forward.3} parent=1 // pred_fallthru
      _
    // Predicated region
    $region10: #{temporal_patches_forward.3} parent=1 // pred_check
      _
    $region11: #{temporal_patches_forward.3} parent=1 // pred_check_branch
      %34 = sbr.rel (0) target = $region13
    $region12: #{temporal_patches_forward.3} parent=1 // pred_region
      _
    $region13: #{temporal_patches_forward.3} parent=1 // pred_fallthru
      _
    // Predicated region
    $region14: #{temporal_patches_forward.3} parent=1 // pred_check
      _
    $region15: #{temporal_patches_forward.3} parent=1 // pred_check_branch
      %36 = sbr.rel (0) target = $region17
    $region16: #{temporal_patches_forward.3} parent=1 // pred_region
      _
    $region17: #{temporal_patches_forward.3} parent=1 // pred_fallthru
      _
    // Predicated region
    $region18: #{temporal_patches_forward.3} parent=1 // pred_check
      _
    $region19: #{temporal_patches_forward.3} parent=1 // pred_check_branch
      %38 = sbr.rel (0) target = $region21
    $region20: #{temporal_patches_forward.3} parent=1 // pred_region
      _
    $region21: #{temporal_patches_forward.3} parent=1 // pred_fallthru
      _
    // Predicated region
    $region22: #{temporal_patches_forward.3} parent=1 // pred_check
      _
    $region23: #{temporal_patches_forward.3} parent=1 // pred_check_branch
      %40 = sbr.rel (0) target = $region25
    $region24: #{temporal_patches_forward.3} parent=1 // pred_region
      _
    $region25: #{temporal_patches_forward.3} parent=1 // pred_fallthru
      _
    // Predicated region
    $region26: #{temporal_patches_forward.3} parent=1 // pred_check
      _
    $region27: #{temporal_patches_forward.3} parent=1 // pred_check_branch
      %42 = sbr.rel (0) target = $region29
    $region28: #{temporal_patches_forward.3} parent=1 // pred_region
      _
    $region29: #{temporal_patches_forward.3} parent=1 // pred_fallthru
      _
    // Predicated region
    $region30: #{temporal_patches_forward.3} parent=1 // pred_check
      _
    $region31: #{temporal_patches_forward.3} parent=1 // pred_check_branch
      %44 = sbr.rel (0) target = $region33
    $region32: #{temporal_patches_forward.3} parent=1 // pred_region
      _
    $region33: #{temporal_patches_forward.3} parent=1 // pred_fallthru
      _
    // Predicated region
    $region34: #{temporal_patches_forward.3} parent=1 // pred_check
      _
    $region35: #{temporal_patches_forward.3} parent=1 // pred_check_branch
      %46 = sbr.rel (0) target = $region37
    $region36: #{temporal_patches_forward.3} parent=1 // pred_region
      _
    $region37: #{temporal_patches_forward.3} parent=1 // pred_fallthru
      _
    // Predicated region
    $region38: #{temporal_patches_forward.3} parent=1 // pred_check
      _
    $region39: #{temporal_patches_forward.3} parent=1 // pred_check_branch
      %48 = sbr.rel (0) target = $region41
    $region40: #{temporal_patches_forward.3} parent=1 // pred_region
      _
    $region41: #{temporal_patches_forward.3} parent=1 // pred_fallthru
      _
    // Predicated region
    $region42: #{temporal_patches_forward.3} parent=1 // pred_check
      _
    $region43: #{temporal_patches_forward.3} parent=1 // pred_check_branch
      %50 = sbr.rel (0) target = $region45
    $region44: #{temporal_patches_forward.3} parent=1 // pred_region
      _
    $region45: #{temporal_patches_forward.3} parent=1 // pred_fallthru
      _
    // Predicated region
    $region46: #{temporal_patches_forward.3} parent=1 // pred_check
      _
    $region47: #{temporal_patches_forward.3} parent=1 // pred_check_branch
      %52 = sbr.rel (0) target = $region49
    $region48: #{temporal_patches_forward.3} parent=1 // pred_region
      _
    $region49: #{temporal_patches_forward.3} parent=1 // pred_fallthru
      _
    // Predicated region
    $region50: #{temporal_patches_forward.3} parent=1 // pred_check
      _
    $region51: #{temporal_patches_forward.3} parent=1 // pred_check_branch
      %54 = sbr.rel (0) target = $region53
    $region52: #{temporal_patches_forward.3} parent=1 // pred_region
      _
    $region53: #{temporal_patches_forward.3} parent=1 // pred_fallthru
      _
    // Predicated region
    $region54: #{temporal_patches_forward.3} parent=1 // pred_check
      _
    $region55: #{temporal_patches_forward.3} parent=1 // pred_check_branch
      %56 = sbr.rel (0) target = $region57
    $region56: #{temporal_patches_forward.3} parent=1 // pred_region
      _
    $region57: #{temporal_patches_forward.3} parent=1 // pred_fallthru
      _
    // Predicated region
    $region58: #{temporal_patches_forward.3} parent=1 // pred_check
      _
    $region59: #{temporal_patches_forward.3} parent=1 // pred_check_branch
      %58 = sbr.rel (0) target = $region61
    $region60: #{temporal_patches_forward.3} parent=1 // pred_region
      _
    $region61: #{temporal_patches_forward.3} parent=1 // pred_fallthru
      _
    // Predicated region
    $region62: #{temporal_patches_forward.3} parent=1 // pred_check
      _
    $region63: #{temporal_patches_forward.3} parent=1 // pred_check_branch
      %60 = sbr.rel (0) target = $region65
    $region64: #{temporal_patches_forward.3} parent=1 // pred_region
      _
    $region65: #{temporal_patches_forward.3} parent=1 // pred_fallthru
      _
    // Predicated region
    $region66: #{temporal_patches_forward.3} parent=1 // pred_check
      _
    $region67: #{temporal_patches_forward.3} parent=1 // pred_check_branch
      %62 = sbr.rel (0) target = $region69
    $region68: #{temporal_patches_forward.3} parent=1 // pred_region
      %64 = dma.done [#allocation3], 16
    $region69: #{temporal_patches_forward.3} parent=1 // pred_fallthru
      _
    %65 = sfence
    %s66 = sld [smem:[#allocation2]]
    %s67 = scalar_lea.vmem %s1, %s66
    %v68 = vld [vmem:[%s67] sm:$0xff]
    %v69 = vld [vmem:[%s67 + $0x30] sm:$0xff]
    %s70 = sld [smem:[#allocation2 + $0x1]]
    %s71 = scalar_lea.vmem %s1, %s70
    %v72 = vld [vmem:[%s71] sm:$0xff]
    %v73 = vld [vmem:[%s71 + $0x30] sm:$0xff]
    %s74 = sld [smem:[#allocation2 + $0x2]]
    %s75 = scalar_lea.vmem %s1, %s74
    %v76 = vld [vmem:[%s75] sm:$0xff]
    %v77 = vld [vmem:[%s75 + $0x30] sm:$0xff]
    %s78 = sld [smem:[#allocation2 + $0x3]]
    %s79 = scalar_lea.vmem %s1, %s78
    %v80 = vld [vmem:[%s79] sm:$0xff]
    %v81 = vld [vmem:[%s79 + $0x30] sm:$0xff]
    %s82 = sld [smem:[#allocation2 + $0x4]]
    %s83 = scalar_lea.vmem %s1, %s82
    %v84 = vld [vmem:[%s83] sm:$0xff]
    %v85 = vld [vmem:[%s83 + $0x30] sm:$0xff]
    %v86 = vld [vmem:[%s2] sm:$0xff]
    %v87 = vld [vmem:[%s2 + $0x8] sm:$0xff]
    %v88 = vld [vmem:[%s2 + $0x10] sm:$0xff]
    %v89 = vld [vmem:[%s2 + $0x18] sm:$0xff]
    %v100 = vrot.slane %v68, 1
    %vm101 = vcmask 1041409
    %v102 = vsel %vm101, %v69, %v100
    %v103 = vrot.slane %v72, 7
    %vm104 = vcmask 1042434
    %v105 = vsel %vm104, %v103, %v102
    %v106 = vrot.slane %v73, 6
    %vm107 = vcmask 1043459
    %v108 = vsel %vm107, %v106, %v105
    %v109 = vrot.slane %v76, 5
    %vm110 = vcmask 1044484
    %v111 = vsel %vm110, %v109, %v108
    %v112 = vrot.slane %v77, 4
    %vm113 = vcmask 1045509
    %v114 = vsel %vm113, %v112, %v111
    %v115 = vrot.slane %v80, 3
    %vm116 = vcmask 1046534
    %v117 = vsel %vm116, %v115, %v114
    %v118 = vrot.slane %v81, 2
    %vm119 = vcmask 1047559
    %v120 = vsel %vm119, %v118, %v117
    %v121 = vrot.slane %v84, 1
    %v122 = vsel %vm101, %v85, %v121
    %vm123 = vcmask 130048
    %v124 = vsel %vm123, %v120, 0
    %v126 = vsel %vm123, %v122, 0
    %128 = vmatpush.msra.mxu0 0.0
    %129 = vmatpush.msra.mxu0 0.0
    %130 = vmatpush.msra.mxu0 0.0
    %131 = vmatpush.msra.mxu0 0.0
    %132 = vmatpush.msra.mxu0 0.0
    %133 = vmatpush.msra.mxu0 0.0
    %134 = vmatpush.msra.mxu0 0.0
    %135 = vmatpush.msra.mxu0 0.0
    %136 = vmatpush.msra.mxu0 0.0
    %137 = vmatpush.msra.mxu0 0.0
    %138 = vmatpush.msra.mxu0 0.0
    %139 = vmatpush.msra.mxu0 0.0
    %140 = vmatpush.msra.mxu0 0.0
    %141 = vmatpush.msra.mxu0 0.0
    %142 = vmatpush.msra.mxu0 %v89
    %143 = vmatpush.msra.mxu0 %v88
    %144 = vmatmul.f32.gmra.mxu0 %v124
    %v145 = vpop.f32.mrf.mxu0
    %v146 = vadd.f32 0.0, %v145
    %147 = vmatmul.f32.gmra.mxu0 %v126
    %v148 = vpop.f32.mrf.mxu0
    %v149 = vadd.f32 0.0, %v148
    %150 = vdwg.mxu0
    %v151 = vld [vmem:[%s2 + $0x20] sm:$0xff]
    %v152 = vld [vmem:[%s2 + $0x28] sm:$0xff]
    %v153 = vrot.slane %v68, 2
    %v154 = vrot.slane %v69, 1
    %v155 = vsel %vm101, %v154, %v153
    %v156 = vsel %vm104, %v72, %v155
    %v157 = vrot.slane %v73, 7
    %v158 = vsel %vm107, %v157, %v156
    %v159 = vrot.slane %v76, 6
    %v160 = vsel %vm110, %v159, %v158
    %v161 = vrot.slane %v77, 5
    %v162 = vsel %vm113, %v161, %v160
    %v163 = vrot.slane %v80, 4
    %v164 = vsel %vm116, %v163, %v162
    %v165 = vrot.slane %v81, 3
    %v166 = vsel %vm119, %v165, %v164
    %v167 = vrot.slane %v84, 2
    %v168 = vrot.slane %v85, 1
    %v169 = vsel %vm101, %v168, %v167
    %v170 = vsel %vm123, %v166, 0
    %v172 = vsel %vm123, %v169, 0
    %174 = vmatpush.msra.mxu0 0.0
    %175 = vmatpush.msra.mxu0 0.0
    %176 = vmatpush.msra.mxu0 0.0
    %177 = vmatpush.msra.mxu0 0.0
    %178 = vmatpush.msra.mxu0 0.0
    %179 = vmatpush.msra.mxu0 0.0
    %180 = vmatpush.msra.mxu0 0.0
    %181 = vmatpush.msra.mxu0 0.0
    %182 = vmatpush.msra.mxu0 0.0
    %183 = vmatpush.msra.mxu0 0.0
    %184 = vmatpush.msra.mxu0 0.0
    %185 = vmatpush.msra.mxu0 0.0
    %186 = vmatpush.msra.mxu0 0.0
    %187 = vmatpush.msra.mxu0 0.0
    %188 = vmatpush.msra.mxu0 %v152
    %189 = vmatpush.msra.mxu0 %v151
    %190 = vmatmul.f32.gmra.mxu0 %v170
    %v191 = vpop.f32.mrf.mxu0
    %v192 = vadd.f32 0.0, %v191
    %193 = vmatmul.f32.gmra.mxu0 %v172
    %v194 = vpop.f32.mrf.mxu0
    %v195 = vadd.f32 0.0, %v194
    %196 = vdwg.mxu0
    %v197 = vld [vmem:[%s2 + $0x30] sm:$0xff]
    %v198 = vld [vmem:[%s2 + $0x38] sm:$0xff]
    %v199 = vrot.slane %v68, 3
    %v200 = vrot.slane %v69, 2
    %v201 = vsel %vm101, %v200, %v199
    %v202 = vrot.slane %v72, 1
    %v203 = vsel %vm104, %v202, %v201
    %v204 = vsel %vm107, %v73, %v203
    %v205 = vrot.slane %v76, 7
    %v206 = vsel %vm110, %v205, %v204
    %v207 = vrot.slane %v77, 6
    %v208 = vsel %vm113, %v207, %v206
    %v209 = vrot.slane %v80, 5
    %v210 = vsel %vm116, %v209, %v208
    %v211 = vrot.slane %v81, 4
    %v212 = vsel %vm119, %v211, %v210
    %v213 = vrot.slane %v84, 3
    %v214 = vrot.slane %v85, 2
    %v215 = vsel %vm101, %v214, %v213
    %v216 = vsel %vm123, %v212, 0
    %v218 = vsel %vm123, %v215, 0
    %220 = vmatpush.msra.mxu0 0.0
    %221 = vmatpush.msra.mxu0 0.0
    %222 = vmatpush.msra.mxu0 0.0
    %223 = vmatpush.msra.mxu0 0.0
    %224 = vmatpush.msra.mxu0 0.0
    %225 = vmatpush.msra.mxu0 0.0
    %226 = vmatpush.msra.mxu0 0.0
    %227 = vmatpush.msra.mxu0 0.0
    %228 = vmatpush.msra.mxu0 0.0
    %229 = vmatpush.msra.mxu0 0.0
    %230 = vmatpush.msra.mxu0 0.0
    %231 = vmatpush.msra.mxu0 0.0
    %232 = vmatpush.msra.mxu0 0.0
    %233 = vmatpush.msra.mxu0 0.0
    %234 = vmatpush.msra.mxu0 %v198
    %235 = vmatpush.msra.mxu0 %v197
    %236 = vmatmul.f32.gmra.mxu0 %v216
    %v237 = vpop.f32.mrf.mxu0
    %v238 = vadd.f32 0.0, %v237
    %239 = vmatmul.f32.gmra.mxu0 %v218
    %v240 = vpop.f32.mrf.mxu0
    %v241 = vadd.f32 0.0, %v240
    %242 = vdwg.mxu0
    %v243 = vld [vmem:[%s2 + $0x40] sm:$0xff]
    %v244 = vld [vmem:[%s2 + $0x48] sm:$0xff]
    %v245 = vrot.slane %v68, 4
    %v246 = vrot.slane %v69, 3
    %v247 = vsel %vm101, %v246, %v245
    %v248 = vrot.slane %v72, 2
    %v249 = vsel %vm104, %v248, %v247
    %v250 = vrot.slane %v73, 1
    %v251 = vsel %vm107, %v250, %v249
    %v252 = vsel %vm110, %v76, %v251
    %v253 = vrot.slane %v77, 7
    %v254 = vsel %vm113, %v253, %v252
    %v255 = vrot.slane %v80, 6
    %v256 = vsel %vm116, %v255, %v254
    %v257 = vrot.slane %v81, 5
    %v258 = vsel %vm119, %v257, %v256
    %v259 = vrot.slane %v84, 4
    %v260 = vrot.slane %v85, 3
    %v261 = vsel %vm101, %v260, %v259
    %v262 = vsel %vm123, %v258, 0
    %v264 = vsel %vm123, %v261, 0
    %266 = vmatpush.msra.mxu0 0.0
    %267 = vmatpush.msra.mxu0 0.0
    %268 = vmatpush.msra.mxu0 0.0
    %269 = vmatpush.msra.mxu0 0.0
    %270 = vmatpush.msra.mxu0 0.0
    %271 = vmatpush.msra.mxu0 0.0
    %272 = vmatpush.msra.mxu0 0.0
    %273 = vmatpush.msra.mxu0 0.0
    %274 = vmatpush.msra.mxu0 0.0
    %275 = vmatpush.msra.mxu0 0.0
    %276 = vmatpush.msra.mxu0 0.0
    %277 = vmatpush.msra.mxu0 0.0
    %278 = vmatpush.msra.mxu0 0.0
    %279 = vmatpush.msra.mxu0 0.0
    %280 = vmatpush.msra.mxu0 %v244
    %281 = vmatpush.msra.mxu0 %v243
    %282 = vmatmul.f32.gmra.mxu0 %v262
    %v283 = vpop.f32.mrf.mxu0
    %v284 = vadd.f32 0.0, %v283
    %285 = vmatmul.f32.gmra.mxu0 %v264
    %v286 = vpop.f32.mrf.mxu0
    %v287 = vadd.f32 0.0, %v286
    %288 = vdwg.mxu0
    %v289 = vld [vmem:[%s2 + $0x50] sm:$0xff]
    %v290 = vld [vmem:[%s2 + $0x58] sm:$0xff]
    %v291 = vrot.slane %v68, 5
    %v292 = vrot.slane %v69, 4
    %v293 = vsel %vm101, %v292, %v291
    %v294 = vrot.slane %v72, 3
    %v295 = vsel %vm104, %v294, %v293
    %v296 = vrot.slane %v73, 2
    %v297 = vsel %vm107, %v296, %v295
    %v298 = vrot.slane %v76, 1
    %v299 = vsel %vm110, %v298, %v297
    %v300 = vsel %vm113, %v77, %v299
    %v301 = vrot.slane %v80, 7
    %v302 = vsel %vm116, %v301, %v300
    %v303 = vrot.slane %v81, 6
    %v304 = vsel %vm119, %v303, %v302
    %v305 = vrot.slane %v84, 5
    %v306 = vrot.slane %v85, 4
    %v307 = vsel %vm101, %v306, %v305
    %v308 = vsel %vm123, %v304, 0
    %v310 = vsel %vm123, %v307, 0
    %312 = vmatpush.msra.mxu0 0.0
    %313 = vmatpush.msra.mxu0 0.0
    %314 = vmatpush.msra.mxu0 0.0
    %315 = vmatpush.msra.mxu0 0.0
    %316 = vmatpush.msra.mxu0 0.0
    %317 = vmatpush.msra.mxu0 0.0
    %318 = vmatpush.msra.mxu0 0.0
    %319 = vmatpush.msra.mxu0 0.0
    %320 = vmatpush.msra.mxu0 0.0
    %321 = vmatpush.msra.mxu0 0.0
    %322 = vmatpush.msra.mxu0 0.0
    %323 = vmatpush.msra.mxu0 0.0
    %324 = vmatpush.msra.mxu0 0.0
    %325 = vmatpush.msra.mxu0 0.0
    %326 = vmatpush.msra.mxu0 %v290
    %327 = vmatpush.msra.mxu0 %v289
    %328 = vmatmul.f32.gmra.mxu0 %v308
    %v329 = vpop.f32.mrf.mxu0
    %v330 = vadd.f32 0.0, %v329
    %331 = vmatmul.f32.gmra.mxu0 %v310
    %v332 = vpop.f32.mrf.mxu0
    %v333 = vadd.f32 0.0, %v332
    %334 = vdwg.mxu0
    %v335 = vld [vmem:[%s2 + $0x60] sm:$0xff]
    %v336 = vld [vmem:[%s2 + $0x68] sm:$0xff]
    %v337 = vrot.slane %v68, 6
    %v338 = vrot.slane %v69, 5
    %v339 = vsel %vm101, %v338, %v337
    %v340 = vrot.slane %v72, 4
    %v341 = vsel %vm104, %v340, %v339
    %v342 = vrot.slane %v73, 3
    %v343 = vsel %vm107, %v342, %v341
    %v344 = vrot.slane %v76, 2
    %v345 = vsel %vm110, %v344, %v343
    %v346 = vrot.slane %v77, 1
    %v347 = vsel %vm113, %v346, %v345
    %v348 = vsel %vm116, %v80, %v347
    %v349 = vrot.slane %v81, 7
    %v350 = vsel %vm119, %v349, %v348
    %v351 = vrot.slane %v84, 6
    %v352 = vrot.slane %v85, 5
    %v353 = vsel %vm101, %v352, %v351
    %v354 = vsel %vm123, %v350, 0
    %v356 = vsel %vm123, %v353, 0
    %358 = vmatpush.msra.mxu0 0.0
    %359 = vmatpush.msra.mxu0 0.0
    %360 = vmatpush.msra.mxu0 0.0
    %361 = vmatpush.msra.mxu0 0.0
    %362 = vmatpush.msra.mxu0 0.0
    %363 = vmatpush.msra.mxu0 0.0
    %364 = vmatpush.msra.mxu0 0.0
    %365 = vmatpush.msra.mxu0 0.0
    %366 = vmatpush.msra.mxu0 0.0
    %367 = vmatpush.msra.mxu0 0.0
    %368 = vmatpush.msra.mxu0 0.0
    %369 = vmatpush.msra.mxu0 0.0
    %370 = vmatpush.msra.mxu0 0.0
    %371 = vmatpush.msra.mxu0 0.0
    %372 = vmatpush.msra.mxu0 %v336
    %373 = vmatpush.msra.mxu0 %v335
    %374 = vmatmul.f32.gmra.mxu0 %v354
    %v375 = vpop.f32.mrf.mxu0
    %v376 = vadd.f32 0.0, %v375
    %377 = vmatmul.f32.gmra.mxu0 %v356
    %v378 = vpop.f32.mrf.mxu0
    %v379 = vadd.f32 0.0, %v378
    %380 = vdwg.mxu0
    %v381 = vld [vmem:[%s2 + $0x70] sm:$0xff]
    %v382 = vld [vmem:[%s2 + $0x78] sm:$0xff]
    %v383 = vrot.slane %v68, 7
    %v384 = vrot.slane %v69, 6
    %v385 = vsel %vm101, %v384, %v383
    %v386 = vrot.slane %v72, 5
    %v387 = vsel %vm104, %v386, %v385
    %v388 = vrot.slane %v73, 4
    %v389 = vsel %vm107, %v388, %v387
    %v390 = vrot.slane %v76, 3
    %v391 = vsel %vm110, %v390, %v389
    %v392 = vrot.slane %v77, 2
    %v393 = vsel %vm113, %v392, %v391
    %v394 = vrot.slane %v80, 1
    %v395 = vsel %vm116, %v394, %v393
    %v396 = vsel %vm119, %v81, %v395
    %v397 = vrot.slane %v84, 7
    %v398 = vrot.slane %v85, 6
    %v399 = vsel %vm101, %v398, %v397
    %v400 = vsel %vm123, %v396, 0
    %v402 = vsel %vm123, %v399, 0
    %404 = vmatpush.msra.mxu0 0.0
    %405 = vmatpush.msra.mxu0 0.0
    %406 = vmatpush.msra.mxu0 0.0
    %407 = vmatpush.msra.mxu0 0.0
    %408 = vmatpush.msra.mxu0 0.0
    %409 = vmatpush.msra.mxu0 0.0
    %410 = vmatpush.msra.mxu0 0.0
    %411 = vmatpush.msra.mxu0 0.0
    %412 = vmatpush.msra.mxu0 0.0
    %413 = vmatpush.msra.mxu0 0.0
    %414 = vmatpush.msra.mxu0 0.0
    %415 = vmatpush.msra.mxu0 0.0
    %416 = vmatpush.msra.mxu0 0.0
    %417 = vmatpush.msra.mxu0 0.0
    %418 = vmatpush.msra.mxu0 %v382
    %419 = vmatpush.msra.mxu0 %v381
    %420 = vmatmul.f32.gmra.mxu0 %v400
    %v421 = vpop.f32.mrf.mxu0
    %v422 = vadd.f32 0.0, %v421
    %423 = vmatmul.f32.gmra.mxu0 %v402
    %v424 = vpop.f32.mrf.mxu0
    %v425 = vadd.f32 0.0, %v424
    %426 = vdwg.mxu0
    %v427 = vrot.slane %v69, 7
    %v428 = vsel %vm101, %v427, %v68
    %v429 = vrot.slane %v72, 6
    %v430 = vsel %vm104, %v429, %v428
    %v431 = vrot.slane %v73, 5
    %v432 = vsel %vm107, %v431, %v430
    %v433 = vrot.slane %v76, 4
    %v434 = vsel %vm110, %v433, %v432
    %v435 = vrot.slane %v77, 3
    %v436 = vsel %vm113, %v435, %v434
    %v437 = vrot.slane %v80, 2
    %v438 = vsel %vm116, %v437, %v436
    %v439 = vrot.slane %v81, 1
    %v440 = vsel %vm119, %v439, %v438
    %v441 = vrot.slane %v85, 7
    %v442 = vsel %vm101, %v441, %v84
    %v443 = vsel %vm123, %v440, 0
    %v445 = vsel %vm123, %v442, 0
    %447 = vmatpush.msra.mxu0 0.0
    %448 = vmatpush.msra.mxu0 0.0
    %449 = vmatpush.msra.mxu0 0.0
    %450 = vmatpush.msra.mxu0 0.0
    %451 = vmatpush.msra.mxu0 0.0
    %452 = vmatpush.msra.mxu0 0.0
    %453 = vmatpush.msra.mxu0 0.0
    %454 = vmatpush.msra.mxu0 0.0
    %455 = vmatpush.msra.mxu0 0.0
    %456 = vmatpush.msra.mxu0 0.0
    %457 = vmatpush.msra.mxu0 0.0
    %458 = vmatpush.msra.mxu0 0.0
    %459 = vmatpush.msra.mxu0 0.0
    %460 = vmatpush.msra.mxu0 0.0
    %461 = vmatpush.msra.mxu0 %v87
    %462 = vmatpush.msra.mxu0 %v86
    %463 = vmatmul.f32.gmra.mxu0 %v443
    %v464 = vpop.f32.mrf.mxu0
    %v465 = vadd.f32 %v146, %v464
    %466 = vmatmul.f32.gmra.mxu0 %v445
    %v467 = vpop.f32.mrf.mxu0
    %v468 = vadd.f32 %v149, %v467
    %469 = vdwg.mxu0
    %v470 = vadd.f32 %v465, %v192
    %v471 = vadd.f32 %v468, %v195
    %v472 = vadd.f32 %v470, %v238
    %v473 = vadd.f32 %v471, %v241
    %v474 = vadd.f32 %v472, %v284
    %v475 = vadd.f32 %v473, %v287
    %v476 = vadd.f32 %v474, %v330
    %v477 = vadd.f32 %v475, %v333
    %v478 = vadd.f32 %v476, %v376
    %v479 = vadd.f32 %v477, %v379
    %v480 = vadd.f32 %v478, %v422
    %v481 = vadd.f32 %v479, %v425
    %v482 = vld [vmem:[%s5] sm:$0xff]
    %v483 = vld [vmem:[%s5 + $0x8] sm:$0xff]
    %v484 = vld [vmem:[%s5 + $0x10] sm:$0xff]
    %v485 = vld [vmem:[%s5 + $0x18] sm:$0xff]
    %v486 = vld [vmem:[%s5 + $0x20] sm:$0xff]
    %v487 = vld [vmem:[%s5 + $0x28] sm:$0xff]
    %v488 = vld [vmem:[%s5 + $0x30] sm:$0xff]
    %v489 = vld [vmem:[%s5 + $0x38] sm:$0xff]
    %vm490 = vcmask 523264
    %v491 = vsel %vm490, %v480, 0.0
    %vm492 = vcmask 517120
    %v493 = vsel %vm492, %v481, 0.0
    %v494 = vadd.f32 %v491, %v493
    %v495 = vrot.slane %v494, 4
    %v496 = vadd.f32 %v494, %v495
    %v497 = vrot.slane %v496, 2
    %v498 = vadd.f32 %v496, %v497
    %v499 = vrot.slane %v498, 1
    %v500 = vadd.f32 %v498, %v499
    %v502 = vsel %vm490, %v500, 0
    %504 = vmatpush.msra.mxu0 0.0
    %505 = vmatpush.msra.mxu0 0.0
    %506 = vmatpush.msra.mxu0 0.0
    %507 = vmatpush.msra.mxu0 0.0
    %508 = vmatpush.msra.mxu0 0.0
    %509 = vmatpush.msra.mxu0 0.0
    %510 = vmatpush.msra.mxu0 0.0
    %511 = vmatpush.msra.mxu0 0.0
    %512 = vmatpush.msra.mxu0 %v489
    %513 = vmatpush.msra.mxu0 %v488
    %514 = vmatpush.msra.mxu0 %v487
    %515 = vmatpush.msra.mxu0 %v486
    %516 = vmatpush.msra.mxu0 %v485
    %517 = vmatpush.msra.mxu0 %v484
    %518 = vmatpush.msra.mxu0 %v483
    %519 = vmatpush.msra.mxu0 %v482
    %520 = vmatmul.f32.gmra.mxu0 %v502
    %v521 = vpop.f32.mrf.mxu0
    %v522 = vadd.f32 0.0, %v521
    %523 = vdwg.mxu0
    %v524 = vmul.f32 %v522, 0.025
    %v525 = vperm.slane %v524, 0
    %v526 = vsub.f32 %v480, %v525
    %v527 = vsub.f32 %v481, %v525
    %v528 = vmul.f32 %v526, %v526
    %v529 = vmul.f32 %v527, %v527
    %v530 = vsel %vm490, %v528, 0.0
    %v531 = vsel %vm492, %v529, 0.0
    %v532 = vadd.f32 %v530, %v531
    %v533 = vrot.slane %v532, 4
    %v534 = vadd.f32 %v532, %v533
    %v535 = vrot.slane %v534, 2
    %v536 = vadd.f32 %v534, %v535
    %v537 = vrot.slane %v536, 1
    %v538 = vadd.f32 %v536, %v537
    %v540 = vsel %vm490, %v538, 0
    %542 = vmatpush.msra.mxu0 0.0
    %543 = vmatpush.msra.mxu0 0.0
    %544 = vmatpush.msra.mxu0 0.0
    %545 = vmatpush.msra.mxu0 0.0
    %546 = vmatpush.msra.mxu0 0.0
    %547 = vmatpush.msra.mxu0 0.0
    %548 = vmatpush.msra.mxu0 0.0
    %549 = vmatpush.msra.mxu0 0.0
    %550 = vmatpush.msra.mxu0 %v489
    %551 = vmatpush.msra.mxu0 %v488
    %552 = vmatpush.msra.mxu0 %v487
    %553 = vmatpush.msra.mxu0 %v486
    %554 = vmatpush.msra.mxu0 %v485
    %555 = vmatpush.msra.mxu0 %v484
    %556 = vmatpush.msra.mxu0 %v483
    %557 = vmatpush.msra.mxu0 %v482
    %558 = vmatmul.f32.gmra.mxu0 %v540
    %v559 = vpop.f32.mrf.mxu0
    %v560 = vadd.f32 0.0, %v559
    %561 = vdwg.mxu0
    %v562 = vmul.f32 %v560, 0.025
    %v563 = vadd.f32 %v562, 1e-05
    %v564 = vrsqrt.pop %v563
    %v565 = vmul.f32 %v564, %v563
    %v566 = vmul.f32 %v565, %v564
    %v567 = vmul.f32 0.5, %v566
    %v568 = vsub.f32 1.5, %v567
    %v569 = vmul.f32 %v564, %v568
    %vm570 = vweird.f32 %v563
    %vm571 = vweird.f32 %v564
    %vm572 = vmor %vm570, %vm571
    %v573 = vsel %vm572, %v564, %v569
    %v574 = vld [vmem:[%s8] sm:$0x1]
    %v575 = vmul.f32 %v573, %v574
    %v576 = vperm.slane %v575, 0
    %v577 = vmul.f32 %v526, %v576
    %v578 = vmul.f32 %v527, %v576
    %v579 = vld [vmem:[%s11] sm:$0x1]
    %v581 = vperm.slane %v579, 0
    %v583 = vadd.f32 %v577, %v581
    %v584 = vadd.f32 %v578, %v581
    %v585 = vmax.f32 %v583, 0.0
    %v586 = vmax.f32 %v584, 0.0
    %v587 = vld [vmem:[%s3] sm:$0xff]
    %v588 = vld [vmem:[%s3 + $0x8] sm:$0xff]
    %v589 = vld [vmem:[%s3 + $0x10] sm:$0xff]
    %v590 = vld [vmem:[%s3 + $0x18] sm:$0xff]
    %v591 = vld [vmem:[%s3 + $0x20] sm:$0xff]
    %v592 = vld [vmem:[%s3 + $0x28] sm:$0xff]
    %v593 = vld [vmem:[%s3 + $0x30] sm:$0xff]
    %v594 = vld [vmem:[%s3 + $0x38] sm:$0xff]
    %v596 = vsel %vm490, %v585, 0
    %v599 = vsel %vm490, %v586, 0
    %601 = vmatpush.msra.mxu0 0.0
    %602 = vmatpush.msra.mxu0 0.0
    %603 = vmatpush.msra.mxu0 0.0
    %604 = vmatpush.msra.mxu0 0.0
    %605 = vmatpush.msra.mxu0 0.0
    %606 = vmatpush.msra.mxu0 0.0
    %607 = vmatpush.msra.mxu0 0.0
    %608 = vmatpush.msra.mxu0 0.0
    %609 = vmatpush.msra.mxu0 %v594
    %610 = vmatpush.msra.mxu0 %v593
    %611 = vmatpush.msra.mxu0 %v592
    %612 = vmatpush.msra.mxu0 %v591
    %613 = vmatpush.msra.mxu0 %v590
    %614 = vmatpush.msra.mxu0 %v589
    %615 = vmatpush.msra.mxu0 %v588
    %616 = vmatpush.msra.mxu0 %v587
    %617 = vmatmul.f32.gmra.mxu0 %v596
    %v618 = vpop.f32.mrf.mxu0
    %v619 = vadd.f32 0.0, %v618
    %620 = vmatmul.f32.gmra.mxu0 %v599
    %v621 = vpop.f32.mrf.mxu0
    %v622 = vadd.f32 0.0, %v621
    %623 = vdwg.mxu0
    %v624 = vld [vmem:[%s6] sm:$0xff]
    %v625 = vld [vmem:[%s6 + $0x8] sm:$0xff]
    %v626 = vld [vmem:[%s6 + $0x10] sm:$0xff]
    %v627 = vld [vmem:[%s6 + $0x18] sm:$0xff]
    %vm628 = vcmask 261120
    %v629 = vsel %vm628, %v619, 0.0
    %vm630 = vcmask 254976
    %v631 = vsel %vm630, %v622, 0.0
    %v632 = vadd.f32 %v629, %v631
    %v633 = vrot.slane %v632, 4
    %v634 = vadd.f32 %v632, %v633
    %v635 = vrot.slane %v634, 2
    %v636 = vadd.f32 %v634, %v635
    %v637 = vrot.slane %v636, 1
    %v638 = vadd.f32 %v636, %v637
    %v640 = vsel %vm628, %v638, 0
    %642 = vmatpush.msra.mxu0 0.0
    %643 = vmatpush.msra.mxu0 0.0
    %644 = vmatpush.msra.mxu0 0.0
    %645 = vmatpush.msra.mxu0 0.0
    %646 = vmatpush.msra.mxu0 0.0
    %647 = vmatpush.msra.mxu0 0.0
    %648 = vmatpush.msra.mxu0 0.0
    %649 = vmatpush.msra.mxu0 0.0
    %650 = vmatpush.msra.mxu0 0.0
    %651 = vmatpush.msra.mxu0 0.0
    %652 = vmatpush.msra.mxu0 0.0
    %653 = vmatpush.msra.mxu0 0.0
    %654 = vmatpush.msra.mxu0 %v627
    %655 = vmatpush.msra.mxu0 %v626
    %656 = vmatpush.msra.mxu0 %v625
    %657 = vmatpush.msra.mxu0 %v624
    %658 = vmatmul.f32.gmra.mxu0 %v640
    %v659 = vpop.f32.mrf.mxu0
    %v660 = vadd.f32 0.0, %v659
    %661 = vdwg.mxu0
    %v662 = vmul.f32 %v660, 0.05
    %v663 = vperm.slane %v662, 0
    %v664 = vsub.f32 %v619, %v663
    %v665 = vsub.f32 %v622, %v663
    %v666 = vmul.f32 %v664, %v664
    %v667 = vmul.f32 %v665, %v665
    %v668 = vsel %vm628, %v666, 0.0
    %v669 = vsel %vm630, %v667, 0.0
    %v670 = vadd.f32 %v668, %v669
    %v671 = vrot.slane %v670, 4
    %v672 = vadd.f32 %v670, %v671
    %v673 = vrot.slane %v672, 2
    %v674 = vadd.f32 %v672, %v673
    %v675 = vrot.slane %v674, 1
    %v676 = vadd.f32 %v674, %v675
    %v678 = vsel %vm628, %v676, 0
    %680 = vmatpush.msra.mxu0 0.0
    %681 = vmatpush.msra.mxu0 0.0
    %682 = vmatpush.msra.mxu0 0.0
    %683 = vmatpush.msra.mxu0 0.0
    %684 = vmatpush.msra.mxu0 0.0
    %685 = vmatpush.msra.mxu0 0.0
    %686 = vmatpush.msra.mxu0 0.0
    %687 = vmatpush.msra.mxu0 0.0
    %688 = vmatpush.msra.mxu0 0.0
    %689 = vmatpush.msra.mxu0 0.0
    %690 = vmatpush.msra.mxu0 0.0
    %691 = vmatpush.msra.mxu0 0.0
    %692 = vmatpush.msra.mxu0 %v627
    %693 = vmatpush.msra.mxu0 %v626
    %694 = vmatpush.msra.mxu0 %v625
    %695 = vmatpush.msra.mxu0 %v624
    %696 = vmatmul.f32.gmra.mxu0 %v678
    %v697 = vpop.f32.mrf.mxu0
    %v698 = vadd.f32 0.0, %v697
    %699 = vdwg.mxu0
    %v700 = vmul.f32 %v698, 0.05
    %v701 = vadd.f32 %v700, 1e-05
    %v702 = vrsqrt.pop %v701
    %v703 = vmul.f32 %v702, %v701
    %v704 = vmul.f32 %v703, %v702
    %v705 = vmul.f32 0.5, %v704
    %v706 = vsub.f32 1.5, %v705
    %v707 = vmul.f32 %v702, %v706
    %vm708 = vweird.f32 %v701
    %vm709 = vweird.f32 %v702
    %vm710 = vmor %vm708, %vm709
    %v711 = vsel %vm710, %v702, %v707
    %v712 = vld [vmem:[%s9] sm:$0x1]
    %v713 = vmul.f32 %v711, %v712
    %v714 = vperm.slane %v713, 0
    %v715 = vmul.f32 %v664, %v714
    %v716 = vmul.f32 %v665, %v714
    %v717 = vld [vmem:[%s12] sm:$0x1]
    %v719 = vperm.slane %v717, 0
    %v721 = vadd.f32 %v715, %v719
    %v722 = vadd.f32 %v716, %v719
    %v723 = vmax.f32 %v721, 0.0
    %v724 = vmax.f32 %v722, 0.0
    %v725 = vld [vmem:[%s4] sm:$0xff]
    %v726 = vld [vmem:[%s4 + $0x8] sm:$0xff]
    %v727 = vld [vmem:[%s4 + $0x10] sm:$0xff]
    %v728 = vld [vmem:[%s4 + $0x18] sm:$0xff]
    %v730 = vsel %vm628, %v723, 0
    %v733 = vsel %vm628, %v724, 0
    %735 = vmatpush.msra.mxu0 0.0
    %736 = vmatpush.msra.mxu0 0.0
    %737 = vmatpush.msra.mxu0 0.0
    %738 = vmatpush.msra.mxu0 0.0
    %739 = vmatpush.msra.mxu0 0.0
    %740 = vmatpush.msra.mxu0 0.0
    %741 = vmatpush.msra.mxu0 0.0
    %742 = vmatpush.msra.mxu0 0.0
    %743 = vmatpush.msra.mxu0 0.0
    %744 = vmatpush.msra.mxu0 0.0
    %745 = vmatpush.msra.mxu0 0.0
    %746 = vmatpush.msra.mxu0 0.0
    %747 = vmatpush.msra.mxu0 %v728
    %748 = vmatpush.msra.mxu0 %v727
    %749 = vmatpush.msra.mxu0 %v726
    %750 = vmatpush.msra.mxu0 %v725
    %751 = vmatmul.f32.gmra.mxu0 %v730
    %v752 = vpop.f32.mrf.mxu0
    %v753 = vadd.f32 0.0, %v752
    %754 = vmatmul.f32.gmra.mxu0 %v733
    %v755 = vpop.f32.mrf.mxu0
    %v756 = vadd.f32 0.0, %v755
    %757 = vdwg.mxu0
    %v758 = vld [vmem:[%s7] sm:$0xff]
    %v759 = vld [vmem:[%s7 + $0x8] sm:$0xff]
    %v760 = vsel %vm123, %v753, 0.0
    %vm761 = vcmask 123904
    %v762 = vsel %vm761, %v756, 0.0
    %v763 = vadd.f32 %v760, %v762
    %v764 = vrot.slane %v763, 4
    %v765 = vadd.f32 %v763, %v764
    %v766 = vrot.slane %v765, 2
    %v767 = vadd.f32 %v765, %v766
    %v768 = vrot.slane %v767, 1
    %v769 = vadd.f32 %v767, %v768
    %v771 = vsel %vm123, %v769, 0
    %773 = vmatpush.msra.mxu0 0.0
    %774 = vmatpush.msra.mxu0 0.0
    %775 = vmatpush.msra.mxu0 0.0
    %776 = vmatpush.msra.mxu0 0.0
    %777 = vmatpush.msra.mxu0 0.0
    %778 = vmatpush.msra.mxu0 0.0
    %779 = vmatpush.msra.mxu0 0.0
    %780 = vmatpush.msra.mxu0 0.0
    %781 = vmatpush.msra.mxu0 0.0
    %782 = vmatpush.msra.mxu0 0.0
    %783 = vmatpush.msra.mxu0 0.0
    %784 = vmatpush.msra.mxu0 0.0
    %785 = vmatpush.msra.mxu0 0.0
    %786 = vmatpush.msra.mxu0 0.0
    %787 = vmatpush.msra.mxu0 %v759
    %788 = vmatpush.msra.mxu0 %v758
    %789 = vmatmul.f32.gmra.mxu0 %v771
    %v790 = vpop.f32.mrf.mxu0
    %v791 = vadd.f32 0.0, %v790
    %792 = vdwg.mxu0
    %v793 = vmul.f32 %v791, 0.1
    %v794 = vperm.slane %v793, 0
    %v795 = vsub.f32 %v753, %v794
    %v796 = vsub.f32 %v756, %v794
    %v797 = vmul.f32 %v795, %v795
    %v798 = vmul.f32 %v796, %v796
    %v799 = vsel %vm123, %v797, 0.0
    %v800 = vsel %vm761, %v798, 0.0
    %v801 = vadd.f32 %v799, %v800
    %v802 = vrot.slane %v801, 4
    %v803 = vadd.f32 %v801, %v802
    %v804 = vrot.slane %v803, 2
    %v805 = vadd.f32 %v803, %v804
    %v806 = vrot.slane %v805, 1
    %v807 = vadd.f32 %v805, %v806
    %v809 = vsel %vm123, %v807, 0
    %811 = vmatpush.msra.mxu0 0.0
    %812 = vmatpush.msra.mxu0 0.0
    %813 = vmatpush.msra.mxu0 0.0
    %814 = vmatpush.msra.mxu0 0.0
    %815 = vmatpush.msra.mxu0 0.0
    %816 = vmatpush.msra.mxu0 0.0
    %817 = vmatpush.msra.mxu0 0.0
    %818 = vmatpush.msra.mxu0 0.0
    %819 = vmatpush.msra.mxu0 0.0
    %820 = vmatpush.msra.mxu0 0.0
    %821 = vmatpush.msra.mxu0 0.0
    %822 = vmatpush.msra.mxu0 0.0
    %823 = vmatpush.msra.mxu0 0.0
    %824 = vmatpush.msra.mxu0 0.0
    %825 = vmatpush.msra.mxu0 %v759
    %826 = vmatpush.msra.mxu0 %v758
    %827 = vmatmul.f32.gmra.mxu0 %v809
    %v828 = vpop.f32.mrf.mxu0
    %v829 = vadd.f32 0.0, %v828
    %830 = vdwg.mxu0
    %v831 = vmul.f32 %v829, 0.1
    %v832 = vadd.f32 %v831, 1e-05
    %v833 = vrsqrt.pop %v832
    %v834 = vmul.f32 %v833, %v832
    %v835 = vmul.f32 %v834, %v833
    %v836 = vmul.f32 0.5, %v835
    %v837 = vsub.f32 1.5, %v836
    %v838 = vmul.f32 %v833, %v837
    %vm839 = vweird.f32 %v832
    %vm840 = vweird.f32 %v833
    %vm841 = vmor %vm839, %vm840
    %v842 = vsel %vm841, %v833, %v838
    %v843 = vld [vmem:[%s10] sm:$0x1]
    %v844 = vmul.f32 %v842, %v843
    %v845 = vperm.slane %v844, 0
    %v846 = vmul.f32 %v795, %v845
    %v847 = vmul.f32 %v796, %v845
    %v848 = vld [vmem:[%s13] sm:$0x1]
    %v850 = vperm.slane %v848, 0
    %v852 = vadd.f32 %v846, %v850
    %v853 = vadd.f32 %v847, %v850
    %v854 = vmax.f32 %v852, 0.0
    %v855 = vmax.f32 %v853, 0.0
    %v856 = vld [vmem:[%s14] sm:$0xff]
    %v857 = vld [vmem:[%s14 + $0x8] sm:$0xff]
    %v858 = vld [vmem:[%s15] sm:$0x1]
    %v860 = vperm.slane %v858, 0
    %v863 = vsel %vm123, %v854, 0
    %v866 = vsel %vm123, %v855, 0
    %868 = vmatpush.msra.mxu0 0.0
    %869 = vmatpush.msra.mxu0 0.0
    %870 = vmatpush.msra.mxu0 0.0
    %871 = vmatpush.msra.mxu0 0.0
    %872 = vmatpush.msra.mxu0 0.0
    %873 = vmatpush.msra.mxu0 0.0
    %874 = vmatpush.msra.mxu0 0.0
    %875 = vmatpush.msra.mxu0 0.0
    %876 = vmatpush.msra.mxu0 0.0
    %877 = vmatpush.msra.mxu0 0.0
    %878 = vmatpush.msra.mxu0 0.0
    %879 = vmatpush.msra.mxu0 0.0
    %880 = vmatpush.msra.mxu0 0.0
    %881 = vmatpush.msra.mxu0 0.0
    %882 = vmatpush.msra.mxu0 %v857
    %883 = vmatpush.msra.mxu0 %v856
    %884 = vmatmul.f32.gmra.mxu0 %v863
    %v885 = vpop.f32.mrf.mxu0
    %v886 = vadd.f32 %v860, %v885
    %887 = vmatmul.f32.gmra.mxu0 %v866
    %v888 = vpop.f32.mrf.mxu0
    %v889 = vadd.f32 %v860, %v888
    %890 = vdwg.mxu0
    %891 = vst.msk [vmem:[%s16] sm:$0xff] %vm123, %v886
    %892 = vst.msk [vmem:[%s16 + $0x8] sm:$0x3] %vm761, %v889
    // Predicated region
    $region70: #{temporal_patches_forward.3} parent=1 // pred_check
      _
    $region71: #{temporal_patches_forward.3} parent=1 // pred_check_branch
      %894 = sbr.rel (0) target = $region73
    $region72: #{temporal_patches_forward.3} parent=1 // pred_region
      _
    $region73: #{temporal_patches_forward.3} parent=1 // pred_fallthru
      _
    // Predicated region
    $region74: #{temporal_patches_forward.3} parent=1 // pred_check
      _
    $region75: #{temporal_patches_forward.3} parent=1 // pred_check_branch
      %896 = sbr.rel (0) target = $region77
    $region76: #{temporal_patches_forward.3} parent=1 // pred_region
      _
    $region77: #{temporal_patches_forward.3} parent=1 // pred_fallthru
      _
    %897 = vsyncpa [#allocation3], 1

// kernel: temporal_patches_forward.2
$region0: #{temporal_patches_forward.2}
  #allocation0 [shape = 'u32[]', space=smem, size = 0x4, offset = 0x4, fixed_abs, tag = 'smem constant byte address 0x4 - core index']
  #allocation1 [shape = 'u32[72,128]{1,0:T(1,128)}', space=vmem, size = 0x9000, scoped, tag = 'internal scratch']
  %s0 = inlined_call_operand.vmem [shape: s32[5], index: 0, kind: input, shape index: {}]
  %s1 = inlined_call_operand.vmem [shape: f32[2,64,32], index: 1, kind: input, shape index: {}]
  %s2 = inlined_call_operand.vmem [shape: f32[256,128], index: 2, kind: input, shape index: {}]
  %s3 = inlined_call_operand.vmem [shape: f32[128,64], index: 3, kind: input, shape index: {}]
  %s4 = inlined_call_operand.vmem [shape: f32[64,32], index: 4, kind: input, shape index: {}]
  %s5 = inlined_call_operand.vmem [shape: f32[128,128], index: 5, kind: input, shape index: {}]
  %s6 = inlined_call_operand.vmem [shape: f32[64,64], index: 6, kind: input, shape index: {}]
  %s7 = inlined_call_operand.vmem [shape: f32[32,32], index: 7, kind: input, shape index: {}]
  %s8 = inlined_call_operand.vmem [shape: f32[1,128], index: 8, kind: input, shape index: {}]
  %s9 = inlined_call_operand.vmem [shape: f32[1,64], index: 9, kind: input, shape index: {}]
  %s10 = inlined_call_operand.vmem [shape: f32[1,32], index: 10, kind: input, shape index: {}]
  %s11 = inlined_call_operand.vmem [shape: f32[1,128], index: 11, kind: input, shape index: {}]
  %s12 = inlined_call_operand.vmem [shape: f32[1,64], index: 12, kind: input, shape index: {}]
  %s13 = inlined_call_operand.vmem [shape: f32[1,32], index: 13, kind: input, shape index: {}]
  %s14 = inlined_call_operand.vmem [shape: f32[32,32], index: 14, kind: input, shape index: {}]
  %s15 = inlined_call_operand.vmem [shape: f32[1,32], index: 15, kind: input, shape index: {}]
  %s16 = inlined_call_operand.vmem [shape: f32[10,32], index: 16, kind: output, shape index: {}]
  %s17 = sld [smem:[#allocation0]]
  $region78: #{temporal_patches_forward.2} parent=0
    _
  %s19 = ssub.s32 1, %s17
  %s20 = scalar_select 0, %s19, %s17
  $region1: #{temporal_patches_forward.2} parent=0
    #allocation2 [shape = 'u8[512]{0}', space=smem, size = 0x200, scoped, tag = 'input window, operand 0, single buffered']
    #allocation3 [shape = 's32[1]{0}', space=sflag, size = 0x4, scoped, tag = 'scoped memory for temporal_patches_forward.2']
    %21 = vsyncpa [#allocation3], 0
    // Predicated region
    $region2: #{temporal_patches_forward.2} parent=1 // pred_check
      _
    $region3: #{temporal_patches_forward.2} parent=1 // pred_check_branch
      %23 = sbr.rel (0) target = $region5
    $region4: #{temporal_patches_forward.2} parent=1 // pred_region
      %25 = vsyncadd [#allocation3], 0
      %s27 = sshll.u32 %s0, 4
      %s28 = int_to_ptr.vmem [resolvable:$true] %s27
      %30 = dma.vmem_to_smem %s28, 16, [#allocation2], [#allocation3]
    $region5: #{temporal_patches_forward.2} parent=1 // pred_fallthru
      _
    // Predicated region
    $region6: #{temporal_patches_forward.2} parent=1 // pred_check
      _
    $region7: #{temporal_patches_forward.2} parent=1 // pred_check_branch
      %32 = sbr.rel (0) target = $region9
    $region8: #{temporal_patches_forward.2} parent=1 // pred_region
      _
    $region9: #{temporal_patches_forward.2} parent=1 // pred_fallthru
      _
    // Predicated region
    $region10: #{temporal_patches_forward.2} parent=1 // pred_check
      _
    $region11: #{temporal_patches_forward.2} parent=1 // pred_check_branch
      %34 = sbr.rel (0) target = $region13
    $region12: #{temporal_patches_forward.2} parent=1 // pred_region
      _
    $region13: #{temporal_patches_forward.2} parent=1 // pred_fallthru
      _
    // Predicated region
    $region14: #{temporal_patches_forward.2} parent=1 // pred_check
      _
    $region15: #{temporal_patches_forward.2} parent=1 // pred_check_branch
      %36 = sbr.rel (0) target = $region17
    $region16: #{temporal_patches_forward.2} parent=1 // pred_region
      _
    $region17: #{temporal_patches_forward.2} parent=1 // pred_fallthru
      _
    // Predicated region
    $region18: #{temporal_patches_forward.2} parent=1 // pred_check
      _
    $region19: #{temporal_patches_forward.2} parent=1 // pred_check_branch
      %38 = sbr.rel (0) target = $region21
    $region20: #{temporal_patches_forward.2} parent=1 // pred_region
      _
    $region21: #{temporal_patches_forward.2} parent=1 // pred_fallthru
      _
    // Predicated region
    $region22: #{temporal_patches_forward.2} parent=1 // pred_check
      _
    $region23: #{temporal_patches_forward.2} parent=1 // pred_check_branch
      %40 = sbr.rel (0) target = $region25
    $region24: #{temporal_patches_forward.2} parent=1 // pred_region
      _
    $region25: #{temporal_patches_forward.2} parent=1 // pred_fallthru
      _
    // Predicated region
    $region26: #{temporal_patches_forward.2} parent=1 // pred_check
      _
    $region27: #{temporal_patches_forward.2} parent=1 // pred_check_branch
      %42 = sbr.rel (0) target = $region29
    $region28: #{temporal_patches_forward.2} parent=1 // pred_region
      _
    $region29: #{temporal_patches_forward.2} parent=1 // pred_fallthru
      _
    // Predicated region
    $region30: #{temporal_patches_forward.2} parent=1 // pred_check
      _
    $region31: #{temporal_patches_forward.2} parent=1 // pred_check_branch
      %44 = sbr.rel (0) target = $region33
    $region32: #{temporal_patches_forward.2} parent=1 // pred_region
      _
    $region33: #{temporal_patches_forward.2} parent=1 // pred_fallthru
      _
    // Predicated region
    $region34: #{temporal_patches_forward.2} parent=1 // pred_check
      _
    $region35: #{temporal_patches_forward.2} parent=1 // pred_check_branch
      %46 = sbr.rel (0) target = $region37
    $region36: #{temporal_patches_forward.2} parent=1 // pred_region
      _
    $region37: #{temporal_patches_forward.2} parent=1 // pred_fallthru
      _
    // Predicated region
    $region38: #{temporal_patches_forward.2} parent=1 // pred_check
      _
    $region39: #{temporal_patches_forward.2} parent=1 // pred_check_branch
      %48 = sbr.rel (0) target = $region41
    $region40: #{temporal_patches_forward.2} parent=1 // pred_region
      _
    $region41: #{temporal_patches_forward.2} parent=1 // pred_fallthru
      _
    // Predicated region
    $region42: #{temporal_patches_forward.2} parent=1 // pred_check
      _
    $region43: #{temporal_patches_forward.2} parent=1 // pred_check_branch
      %50 = sbr.rel (0) target = $region45
    $region44: #{temporal_patches_forward.2} parent=1 // pred_region
      _
    $region45: #{temporal_patches_forward.2} parent=1 // pred_fallthru
      _
    // Predicated region
    $region46: #{temporal_patches_forward.2} parent=1 // pred_check
      _
    $region47: #{temporal_patches_forward.2} parent=1 // pred_check_branch
      %52 = sbr.rel (0) target = $region49
    $region48: #{temporal_patches_forward.2} parent=1 // pred_region
      _
    $region49: #{temporal_patches_forward.2} parent=1 // pred_fallthru
      _
    // Predicated region
    $region50: #{temporal_patches_forward.2} parent=1 // pred_check
      _
    $region51: #{temporal_patches_forward.2} parent=1 // pred_check_branch
      %54 = sbr.rel (0) target = $region53
    $region52: #{temporal_patches_forward.2} parent=1 // pred_region
      _
    $region53: #{temporal_patches_forward.2} parent=1 // pred_fallthru
      _
    // Predicated region
    $region54: #{temporal_patches_forward.2} parent=1 // pred_check
      _
    $region55: #{temporal_patches_forward.2} parent=1 // pred_check_branch
      %56 = sbr.rel (0) target = $region57
    $region56: #{temporal_patches_forward.2} parent=1 // pred_region
      _
    $region57: #{temporal_patches_forward.2} parent=1 // pred_fallthru
      _
    // Predicated region
    $region58: #{temporal_patches_forward.2} parent=1 // pred_check
      _
    $region59: #{temporal_patches_forward.2} parent=1 // pred_check_branch
      %58 = sbr.rel (0) target = $region61
    $region60: #{temporal_patches_forward.2} parent=1 // pred_region
      _
    $region61: #{temporal_patches_forward.2} parent=1 // pred_fallthru
      _
    // Predicated region
    $region62: #{temporal_patches_forward.2} parent=1 // pred_check
      _
    $region63: #{temporal_patches_forward.2} parent=1 // pred_check_branch
      %60 = sbr.rel (0) target = $region65
    $region64: #{temporal_patches_forward.2} parent=1 // pred_region
      _
    $region65: #{temporal_patches_forward.2} parent=1 // pred_fallthru
      _
    // Predicated region
    $region66: #{temporal_patches_forward.2} parent=1 // pred_check
      _
    $region67: #{temporal_patches_forward.2} parent=1 // pred_check_branch
      %62 = sbr.rel (0) target = $region69
    $region68: #{temporal_patches_forward.2} parent=1 // pred_region
      %64 = dma.done [#allocation3], 16
    $region69: #{temporal_patches_forward.2} parent=1 // pred_fallthru
      _
    %65 = sfence
    %s66 = sld [smem:[#allocation2]]
    %s67 = scalar_lea.vmem %s1, %s66
    %v68 = vld [vmem:[%s67] sm:$0xff]
    %v69 = vld [vmem:[%s67 + $0x40] sm:$0xff]
    %s70 = sld [smem:[#allocation2 + $0x1]]
    %s71 = scalar_lea.vmem %s1, %s70
    %v72 = vld [vmem:[%s71] sm:$0xff]
    %v73 = vld [vmem:[%s71 + $0x40] sm:$0xff]
    %s74 = sld [smem:[#allocation2 + $0x2]]
    %s75 = scalar_lea.vmem %s1, %s74
    %v76 = vld [vmem:[%s75] sm:$0xff]
    %v77 = vld [vmem:[%s75 + $0x40] sm:$0xff]
    %s78 = sld [smem:[#allocation2 + $0x3]]
    %s79 = scalar_lea.vmem %s1, %s78
    %v80 = vld [vmem:[%s79] sm:$0xff]
    %v81 = vld [vmem:[%s79 + $0x40] sm:$0xff]
    %s82 = sld [smem:[#allocation2 + $0x4]]
    %s83 = scalar_lea.vmem %s1, %s82
    %v84 = vld [vmem:[%s83] sm:$0xff]
    %v85 = vld [vmem:[%s83 + $0x40] sm:$0xff]
    %v86 = vld [vmem:[%s2] sm:$0xff]
    %v87 = vld [vmem:[%s2 + $0x8] sm:$0xff]
    %v88 = vld [vmem:[%s2 + $0x10] sm:$0xff]
    %v89 = vld [vmem:[%s2 + $0x18] sm:$0xff]
    %v90 = vld [vmem:[%s2 + $0x20] sm:$0xff]
    %v91 = vld [vmem:[%s2 + $0x28] sm:$0xff]
    %v92 = vld [vmem:[%s2 + $0x30] sm:$0xff]
    %v93 = vld [vmem:[%s2 + $0x38] sm:$0xff]
    %v104 = vrot.slane %v68, 1
    %vm105 = vcmask 1041409
    %v106 = vsel %vm105, %v69, %v104
    %v107 = vrot.slane %v72, 7
    %vm108 = vcmask 1042434
    %v109 = vsel %vm108, %v107, %v106
    %v110 = vrot.slane %v73, 6
    %vm111 = vcmask 1043459
    %v112 = vsel %vm111, %v110, %v109
    %v113 = vrot.slane %v76, 5
    %vm114 = vcmask 1044484
    %v115 = vsel %vm114, %v113, %v112
    %v116 = vrot.slane %v77, 4
    %vm117 = vcmask 1045509
    %v118 = vsel %vm117, %v116, %v115
    %v119 = vrot.slane %v80, 3
    %vm120 = vcmask 1046534
    %v121 = vsel %vm120, %v119, %v118
    %v122 = vrot.slane %v81, 2
    %vm123 = vcmask 1047559
    %v124 = vsel %vm123, %v122, %v121
    %v125 = vrot.slane %v84, 1
    %v126 = vsel %vm105, %v85, %v125
    %vm127 = vcmask 261120
    %v128 = vsel %vm127, %v124, 0
    %v130 = vsel %vm127, %v126, 0
    %132 = vmatpush.msra.mxu0 0.0
    %133 = vmatpush.msra.mxu0 0.0
    %134 = vmatpush.msra.mxu0 0.0
    %135 = vmatpush.msra.mxu0 0.0
    %136 = vmatpush.msra.mxu0 0.0
    %137 = vmatpush.msra.mxu0 0.0
    %138 = vmatpush.msra.mxu0 0.0
    %139 = vmatpush.msra.mxu0 0.0
    %140 = vmatpush.msra.mxu0 0.0
    %141 = vmatpush.msra.mxu0 0.0
    %142 = vmatpush.msra.mxu0 0.0
    %143 = vmatpush.msra.mxu0 0.0
    %144 = vmatpush.msra.mxu0 %v93
    %145 = vmatpush.msra.mxu0 %v92
    %146 = vmatpush.msra.mxu0 %v91
    %147 = vmatpush.msra.mxu0 %v90
    %148 = vmatmul.f32.gmra.mxu0 %v128
    %v149 = vpop.f32.mrf.mxu0
    %v150 = vadd.f32 0.0, %v149
    %151 = vmatmul.f32.gmra.mxu0 %v130
    %v152 = vpop.f32.mrf.mxu0
    %v153 = vadd.f32 0.0, %v152
    %154 = vdwg.mxu0
    %v155 = vld [vmem:[%s2 + $0x40] sm:$0xff]
    %v156 = vld [vmem:[%s2 + $0x48] sm:$0xff]
    %v157 = vld [vmem:[%s2 + $0x50] sm:$0xff]
    %v158 = vld [vmem:[%s2 + $0x58] sm:$0xff]
    %v159 = vrot.slane %v68, 2
    %v160 = vrot.slane %v69, 1
    %v161 = vsel %vm105, %v160, %v159
    %v162 = vsel %vm108, %v72, %v161
    %v163 = vrot.slane %v73, 7
    %v164 = vsel %vm111, %v163, %v162
    %v165 = vrot.slane %v76, 6
    %v166 = vsel %vm114, %v165, %v164
    %v167 = vrot.slane %v77, 5
    %v168 = vsel %vm117, %v167, %v166
    %v169 = vrot.slane %v80, 4
    %v170 = vsel %vm120, %v169, %v168
    %v171 = vrot.slane %v81, 3
    %v172 = vsel %vm123, %v171, %v170
    %v173 = vrot.slane %v84, 2
    %v174 = vrot.slane %v85, 1
    %v175 = vsel %vm105, %v174, %v173
    %v176 = vsel %vm127, %v172, 0
    %v178 = vsel %vm127, %v175, 0
    %180 = vmatpush.msra.mxu0 0.0
    %181 = vmatpush.msra.mxu0 0.0
    %182 = vmatpush.msra.mxu0 0.0
    %183 = vmatpush.msra.mxu0 0.0
    %184 = vmatpush.msra.mxu0 0.0
    %185 = vmatpush.msra.mxu0 0.0
    %186 = vmatpush.msra.mxu0 0.0
    %187 = vmatpush.msra.mxu0 0.0
    %188 = vmatpush.msra.mxu0 0.0
    %189 = vmatpush.msra.mxu0 0.0
    %190 = vmatpush.msra.mxu0 0.0
    %191 = vmatpush.msra.mxu0 0.0
    %192 = vmatpush.msra.mxu0 %v158
    %193 = vmatpush.msra.mxu0 %v157
    %194 = vmatpush.msra.mxu0 %v156
    %195 = vmatpush.msra.mxu0 %v155
    %196 = vmatmul.f32.gmra.mxu0 %v176
    %v197 = vpop.f32.mrf.mxu0
    %v198 = vadd.f32 0.0, %v197
    %199 = vmatmul.f32.gmra.mxu0 %v178
    %v200 = vpop.f32.mrf.mxu0
    %v201 = vadd.f32 0.0, %v200
    %202 = vdwg.mxu0
    %v203 = vld [vmem:[%s2 + $0x60] sm:$0xff]
    %v204 = vld [vmem:[%s2 + $0x68] sm:$0xff]
    %v205 = vld [vmem:[%s2 + $0x70] sm:$0xff]
    %v206 = vld [vmem:[%s2 + $0x78] sm:$0xff]
    %v207 = vrot.slane %v68, 3
    %v208 = vrot.slane %v69, 2
    %v209 = vsel %vm105, %v208, %v207
    %v210 = vrot.slane %v72, 1
    %v211 = vsel %vm108, %v210, %v209
    %v212 = vsel %vm111, %v73, %v211
    %v213 = vrot.slane %v76, 7
    %v214 = vsel %vm114, %v213, %v212
    %v215 = vrot.slane %v77, 6
    %v216 = vsel %vm117, %v215, %v214
    %v217 = vrot.slane %v80, 5
    %v218 = vsel %vm120, %v217, %v216
    %v219 = vrot.slane %v81, 4
    %v220 = vsel %vm123, %v219, %v218
    %v221 = vrot.slane %v84, 3
    %v222 = vrot.slane %v85, 2
    %v223 = vsel %vm105, %v222, %v221
    %v224 = vsel %vm127, %v220, 0
    %v226 = vsel %vm127, %v223, 0
    %228 = vmatpush.msra.mxu0 0.0
    %229 = vmatpush.msra.mxu0 0.0
    %230 = vmatpush.msra.mxu0 0.0
    %231 = vmatpush.msra.mxu0 0.0
    %232 = vmatpush.msra.mxu0 0.0
    %233 = vmatpush.msra.mxu0 0.0
    %234 = vmatpush.msra.mxu0 0.0
    %235 = vmatpush.msra.mxu0 0.0
    %236 = vmatpush.msra.mxu0 0.0
    %237 = vmatpush.msra.mxu0 0.0
    %238 = vmatpush.msra.mxu0 0.0
    %239 = vmatpush.msra.mxu0 0.0
    %240 = vmatpush.msra.mxu0 %v206
    %241 = vmatpush.msra.mxu0 %v205
    %242 = vmatpush.msra.mxu0 %v204
    %243 = vmatpush.msra.mxu0 %v203
    %244 = vmatmul.f32.gmra.mxu0 %v224
    %v245 = vpop.f32.mrf.mxu0
    %v246 = vadd.f32 0.0, %v245
    %247 = vmatmul.f32.gmra.mxu0 %v226
    %v248 = vpop.f32.mrf.mxu0
    %v249 = vadd.f32 0.0, %v248
    %250 = vdwg.mxu0
    %v251 = vld [vmem:[%s2 + $0x80] sm:$0xff]
    %v252 = vld [vmem:[%s2 + $0x88] sm:$0xff]
    %v253 = vld [vmem:[%s2 + $0x90] sm:$0xff]
    %v254 = vld [vmem:[%s2 + $0x98] sm:$0xff]
    %v255 = vrot.slane %v68, 4
    %v256 = vrot.slane %v69, 3
    %v257 = vsel %vm105, %v256, %v255
    %v258 = vrot.slane %v72, 2
    %v259 = vsel %vm108, %v258, %v257
    %v260 = vrot.slane %v73, 1
    %v261 = vsel %vm111, %v260, %v259
    %v262 = vsel %vm114, %v76, %v261
    %v263 = vrot.slane %v77, 7
    %v264 = vsel %vm117, %v263, %v262
    %v265 = vrot.slane %v80, 6
    %v266 = vsel %vm120, %v265, %v264
    %v267 = vrot.slane %v81, 5
    %v268 = vsel %vm123, %v267, %v266
    %v269 = vrot.slane %v84, 4
    %v270 = vrot.slane %v85, 3
    %v271 = vsel %vm105, %v270, %v269
    %v272 = vsel %vm127, %v268, 0
    %v274 = vsel %vm127, %v271, 0
    %276 = vmatpush.msra.mxu0 0.0
    %277 = vmatpush.msra.mxu0 0.0
    %278 = vmatpush.msra.mxu0 0.0
    %279 = vmatpush.msra.mxu0 0.0
    %280 = vmatpush.msra.mxu0 0.0
    %281 = vmatpush.msra.mxu0 0.0
    %282 = vmatpush.msra.mxu0 0.0
    %283 = vmatpush.msra.mxu0 0.0
    %284 = vmatpush.msra.mxu0 0.0
    %285 = vmatpush.msra.mxu0 0.0
    %286 = vmatpush.msra.mxu0 0.0
    %287 = vmatpush.msra.mxu0 0.0
    %288 = vmatpush.msra.mxu0 %v254
    %289 = vmatpush.msra.mxu0 %v253
    %290 = vmatpush.msra.mxu0 %v252
    %291 = vmatpush.msra.mxu0 %v251
    %292 = vmatmul.f32.gmra.mxu0 %v272
    %v293 = vpop.f32.mrf.mxu0
    %v294 = vadd.f32 0.0, %v293
    %295 = vmatmul.f32.gmra.mxu0 %v274
    %v296 = vpop.f32.mrf.mxu0
    %v297 = vadd.f32 0.0, %v296
    %298 = vdwg.mxu0
    %v299 = vld [vmem:[%s2 + $0xa0] sm:$0xff]
    %v300 = vld [vmem:[%s2 + $0xa8] sm:$0xff]
    %v301 = vld [vmem:[%s2 + $0xb0] sm:$0xff]
    %v302 = vld [vmem:[%s2 + $0xb8] sm:$0xff]
    %v303 = vrot.slane %v68, 5
    %v304 = vrot.slane %v69, 4
    %v305 = vsel %vm105, %v304, %v303
    %v306 = vrot.slane %v72, 3
    %v307 = vsel %vm108, %v306, %v305
    %v308 = vrot.slane %v73, 2
    %v309 = vsel %vm111, %v308, %v307
    %v310 = vrot.slane %v76, 1
    %v311 = vsel %vm114, %v310, %v309
    %v312 = vsel %vm117, %v77, %v311
    %v313 = vrot.slane %v80, 7
    %v314 = vsel %vm120, %v313, %v312
    %v315 = vrot.slane %v81, 6
    %v316 = vsel %vm123, %v315, %v314
    %v317 = vrot.slane %v84, 5
    %v318 = vrot.slane %v85, 4
    %v319 = vsel %vm105, %v318, %v317
    %v320 = vsel %vm127, %v316, 0
    %v322 = vsel %vm127, %v319, 0
    %324 = vmatpush.msra.mxu0 0.0
    %325 = vmatpush.msra.mxu0 0.0
    %326 = vmatpush.msra.mxu0 0.0
    %327 = vmatpush.msra.mxu0 0.0
    %328 = vmatpush.msra.mxu0 0.0
    %329 = vmatpush.msra.mxu0 0.0
    %330 = vmatpush.msra.mxu0 0.0
    %331 = vmatpush.msra.mxu0 0.0
    %332 = vmatpush.msra.mxu0 0.0
    %333 = vmatpush.msra.mxu0 0.0
    %334 = vmatpush.msra.mxu0 0.0
    %335 = vmatpush.msra.mxu0 0.0
    %336 = vmatpush.msra.mxu0 %v302
    %337 = vmatpush.msra.mxu0 %v301
    %338 = vmatpush.msra.mxu0 %v300
    %339 = vmatpush.msra.mxu0 %v299
    %340 = vmatmul.f32.gmra.mxu0 %v320
    %v341 = vpop.f32.mrf.mxu0
    %v342 = vadd.f32 0.0, %v341
    %343 = vmatmul.f32.gmra.mxu0 %v322
    %v344 = vpop.f32.mrf.mxu0
    %v345 = vadd.f32 0.0, %v344
    %346 = vdwg.mxu0
    %v347 = vld [vmem:[%s2 + $0xc0] sm:$0xff]
    %v348 = vld [vmem:[%s2 + $0xc8] sm:$0xff]
    %v349 = vld [vmem:[%s2 + $0xd0] sm:$0xff]
    %v350 = vld [vmem:[%s2 + $0xd8] sm:$0xff]
    %v351 = vrot.slane %v68, 6
    %v352 = vrot.slane %v69, 5
    %v353 = vsel %vm105, %v352, %v351
    %v354 = vrot.slane %v72, 4
    %v355 = vsel %vm108, %v354, %v353
    %v356 = vrot.slane %v73, 3
    %v357 = vsel %vm111, %v356, %v355
    %v358 = vrot.slane %v76, 2
    %v359 = vsel %vm114, %v358, %v357
    %v360 = vrot.slane %v77, 1
    %v361 = vsel %vm117, %v360, %v359
    %v362 = vsel %vm120, %v80, %v361
    %v363 = vrot.slane %v81, 7
    %v364 = vsel %vm123, %v363, %v362
    %v365 = vrot.slane %v84, 6
    %v366 = vrot.slane %v85, 5
    %v367 = vsel %vm105, %v366, %v365
    %v368 = vsel %vm127, %v364, 0
    %v370 = vsel %vm127, %v367, 0
    %372 = vmatpush.msra.mxu0 0.0
    %373 = vmatpush.msra.mxu0 0.0
    %374 = vmatpush.msra.mxu0 0.0
    %375 = vmatpush.msra.mxu0 0.0
    %376 = vmatpush.msra.mxu0 0.0
    %377 = vmatpush.msra.mxu0 0.0
    %378 = vmatpush.msra.mxu0 0.0
    %379 = vmatpush.msra.mxu0 0.0
    %380 = vmatpush.msra.mxu0 0.0
    %381 = vmatpush.msra.mxu0 0.0
    %382 = vmatpush.msra.mxu0 0.0
    %383 = vmatpush.msra.mxu0 0.0
    %384 = vmatpush.msra.mxu0 %v350
    %385 = vmatpush.msra.mxu0 %v349
    %386 = vmatpush.msra.mxu0 %v348
    %387 = vmatpush.msra.mxu0 %v347
    %388 = vmatmul.f32.gmra.mxu0 %v368
    %v389 = vpop.f32.mrf.mxu0
    %v390 = vadd.f32 0.0, %v389
    %391 = vmatmul.f32.gmra.mxu0 %v370
    %v392 = vpop.f32.mrf.mxu0
    %v393 = vadd.f32 0.0, %v392
    %394 = vdwg.mxu0
    %v395 = vld [vmem:[%s2 + $0xe0] sm:$0xff]
    %v396 = vld [vmem:[%s2 + $0xe8] sm:$0xff]
    %v397 = vld [vmem:[%s2 + $0xf0] sm:$0xff]
    %v398 = vld [vmem:[%s2 + $0xf8] sm:$0xff]
    %v399 = vrot.slane %v68, 7
    %v400 = vrot.slane %v69, 6
    %v401 = vsel %vm105, %v400, %v399
    %v402 = vrot.slane %v72, 5
    %v403 = vsel %vm108, %v402, %v401
    %v404 = vrot.slane %v73, 4
    %v405 = vsel %vm111, %v404, %v403
    %v406 = vrot.slane %v76, 3
    %v407 = vsel %vm114, %v406, %v405
    %v408 = vrot.slane %v77, 2
    %v409 = vsel %vm117, %v408, %v407
    %v410 = vrot.slane %v80, 1
    %v411 = vsel %vm120, %v410, %v409
    %v412 = vsel %vm123, %v81, %v411
    %v413 = vrot.slane %v84, 7
    %v414 = vrot.slane %v85, 6
    %v415 = vsel %vm105, %v414, %v413
    %v416 = vsel %vm127, %v412, 0
    %v418 = vsel %vm127, %v415, 0
    %420 = vmatpush.msra.mxu0 0.0
    %421 = vmatpush.msra.mxu0 0.0
    %422 = vmatpush.msra.mxu0 0.0
    %423 = vmatpush.msra.mxu0 0.0
    %424 = vmatpush.msra.mxu0 0.0
    %425 = vmatpush.msra.mxu0 0.0
    %426 = vmatpush.msra.mxu0 0.0
    %427 = vmatpush.msra.mxu0 0.0
    %428 = vmatpush.msra.mxu0 0.0
    %429 = vmatpush.msra.mxu0 0.0
    %430 = vmatpush.msra.mxu0 0.0
    %431 = vmatpush.msra.mxu0 0.0
    %432 = vmatpush.msra.mxu0 %v398
    %433 = vmatpush.msra.mxu0 %v397
    %434 = vmatpush.msra.mxu0 %v396
    %435 = vmatpush.msra.mxu0 %v395
    %436 = vmatmul.f32.gmra.mxu0 %v416
    %v437 = vpop.f32.mrf.mxu0
    %v438 = vadd.f32 0.0, %v437
    %439 = vmatmul.f32.gmra.mxu0 %v418
    %v440 = vpop.f32.mrf.mxu0
    %v441 = vadd.f32 0.0, %v440
    %442 = vdwg.mxu0
    %v443 = vrot.slane %v69, 7
    %v444 = vsel %vm105, %v443, %v68
    %v445 = vrot.slane %v72, 6
    %v446 = vsel %vm108, %v445, %v444
    %v447 = vrot.slane %v73, 5
    %v448 = vsel %vm111, %v447, %v446
    %v449 = vrot.slane %v76, 4
    %v450 = vsel %vm114, %v449, %v448
    %v451 = vrot.slane %v77, 3
    %v452 = vsel %vm117, %v451, %v450
    %v453 = vrot.slane %v80, 2
    %v454 = vsel %vm120, %v453, %v452
    %v455 = vrot.slane %v81, 1
    %v456 = vsel %vm123, %v455, %v454
    %v457 = vrot.slane %v85, 7
    %v458 = vsel %vm105, %v457, %v84
    %v459 = vsel %vm127, %v456, 0
    %v461 = vsel %vm127, %v458, 0
    %463 = vmatpush.msra.mxu0 0.0
    %464 = vmatpush.msra.mxu0 0.0
    %465 = vmatpush.msra.mxu0 0.0
    %466 = vmatpush.msra.mxu0 0.0
    %467 = vmatpush.msra.mxu0 0.0
    %468 = vmatpush.msra.mxu0 0.0
    %469 = vmatpush.msra.mxu0 0.0
    %470 = vmatpush.msra.mxu0 0.0
    %471 = vmatpush.msra.mxu0 0.0
    %472 = vmatpush.msra.mxu0 0.0
    %473 = vmatpush.msra.mxu0 0.0
    %474 = vmatpush.msra.mxu0 0.0
    %475 = vmatpush.msra.mxu0 %v89
    %476 = vmatpush.msra.mxu0 %v88
    %477 = vmatpush.msra.mxu0 %v87
    %478 = vmatpush.msra.mxu0 %v86
    %479 = vmatmul.f32.gmra.mxu0 %v459
    %v480 = vpop.f32.mrf.mxu0
    %v481 = vadd.f32 %v150, %v480
    %482 = vmatmul.f32.gmra.mxu0 %v461
    %v483 = vpop.f32.mrf.mxu0
    %v484 = vadd.f32 %v153, %v483
    %485 = vdwg.mxu0
    %v486 = vadd.f32 %v481, %v198
    %v487 = vadd.f32 %v484, %v201
    %v488 = vadd.f32 %v486, %v246
    %v489 = vadd.f32 %v487, %v249
    %v490 = vadd.f32 %v488, %v294
    %v491 = vadd.f32 %v489, %v297
    %v492 = vadd.f32 %v490, %v342
    %v493 = vadd.f32 %v491, %v345
    %v494 = vadd.f32 %v492, %v390
    %v495 = vadd.f32 %v493, %v393
    %v496 = vadd.f32 %v494, %v438
    %v497 = vadd.f32 %v495, %v441
    %v498 = vld [vmem:[%s5] sm:$0xff]
    %v499 = vld [vmem:[%s5 + $0x8] sm:$0xff]
    %v500 = vld [vmem:[%s5 + $0x10] sm:$0xff]
    %v501 = vld [vmem:[%s5 + $0x18] sm:$0xff]
    %v502 = vld [vmem:[%s5 + $0x20] sm:$0xff]
    %v503 = vld [vmem:[%s5 + $0x28] sm:$0xff]
    %v504 = vld [vmem:[%s5 + $0x30] sm:$0xff]
    %v505 = vld [vmem:[%s5 + $0x38] sm:$0xff]
    %v506 = vld [vmem:[%s5 + $0x40] sm:$0xff]
    %v507 = vld [vmem:[%s5 + $0x48] sm:$0xff]
    %v508 = vld [vmem:[%s5 + $0x50] sm:$0xff]
    %v509 = vld [vmem:[%s5 + $0x58] sm:$0xff]
    %v510 = vld [vmem:[%s5 + $0x60] sm:$0xff]
    %v511 = vld [vmem:[%s5 + $0x68] sm:$0xff]
    %v512 = vld [vmem:[%s5 + $0x70] sm:$0xff]
    %v513 = vld [vmem:[%s5 + $0x78] sm:$0xff]
    %vm514 = vcmask 1041408
    %v515 = vsel %vm514, %v497, 0.0
    %v516 = vadd.f32 %v496, %v515
    %v517 = vrot.slane %v516, 4
    %v518 = vadd.f32 %v516, %v517
    %v519 = vrot.slane %v518, 2
    %v520 = vadd.f32 %v518, %v519
    %v521 = vrot.slane %v520, 1
    %v522 = vadd.f32 %v520, %v521
    %523 = vmatpush.msra.mxu0 %v513
    %524 = vmatpush.msra.mxu0 %v512
    %525 = vmatpush.msra.mxu0 %v511
    %526 = vmatpush.msra.mxu0 %v510
    %527 = vmatpush.msra.mxu0 %v509
    %528 = vmatpush.msra.mxu0 %v508
    %529 = vmatpush.msra.mxu0 %v507
    %530 = vmatpush.msra.mxu0 %v506
    %531 = vmatpush.msra.mxu0 %v505
    %532 = vmatpush.msra.mxu0 %v504
    %533 = vmatpush.msra.mxu0 %v503
    %534 = vmatpush.msra.mxu0 %v502
    %535 = vmatpush.msra.mxu0 %v501
    %536 = vmatpush.msra.mxu0 %v500
    %537 = vmatpush.msra.mxu0 %v499
    %538 = vmatpush.msra.mxu0 %v498
    %539 = vmatmul.f32.gmra.mxu0 %v522
    %v540 = vpop.f32.mrf.mxu0
    %v541 = vadd.f32 0.0, %v540
    %542 = vdwg.mxu0
    %v543 = vmul.f32 %v541, 0.025
    %v544 = vperm.slane %v543, 0
    %v545 = vsub.f32 %v496, %v544
    %v546 = vsub.f32 %v497, %v544
    %v547 = vmul.f32 %v545, %v545
    %v548 = vmul.f32 %v546, %v546
    %v549 = vsel %vm514, %v548, 0.0
    %v550 = vadd.f32 %v547, %v549
    %v551 = vrot.slane %v550, 4
    %v552 = vadd.f32 %v550, %v551
    %v553 = vrot.slane %v552, 2
    %v554 = vadd.f32 %v552, %v553
    %v555 = vrot.slane %v554, 1
    %v556 = vadd.f32 %v554, %v555
    %557 = vmatpush.msra.mxu0 %v513
    %558 = vmatpush.msra.mxu0 %v512
    %559 = vmatpush.msra.mxu0 %v511
    %560 = vmatpush.msra.mxu0 %v510
    %561 = vmatpush.msra.mxu0 %v509
    %562 = vmatpush.msra.mxu0 %v508
    %563 = vmatpush.msra.mxu0 %v507
    %564 = vmatpush.msra.mxu0 %v506
    %565 = vmatpush.msra.mxu0 %v505
    %566 = vmatpush.msra.mxu0 %v504
    %567 = vmatpush.msra.mxu0 %v503
    %568 = vmatpush.msra.mxu0 %v502
    %569 = vmatpush.msra.mxu0 %v501
    %570 = vmatpush.msra.mxu0 %v500
    %571 = vmatpush.msra.mxu0 %v499
    %572 = vmatpush.msra.mxu0 %v498
    %573 = vmatmul.f32.gmra.mxu0 %v556
    %v574 = vpop.f32.mrf.mxu0
    %v575 = vadd.f32 0.0, %v574
    %576 = vdwg.mxu0
    %v577 = vmul.f32 %v575, 0.025
    %v578 = vadd.f32 %v577, 1e-05
    %v579 = vrsqrt.pop %v578
    %v580 = vmul.f32 %v579, %v578
    %v581 = vmul.f32 %v580, %v579
    %v582 = vmul.f32 0.5, %v581
    %v583 = vsub.f32 1.5, %v582
    %v584 = vmul.f32 %v579, %v583
    %vm585 = vweird.f32 %v578
    %vm586 = vweird.f32 %v579
    %vm587 = vmor %vm585, %vm586
    %v588 = vsel %vm587, %v579, %v584
    %v589 = vld [vmem:[%s8] sm:$0x1]
    %v590 = vmul.f32 %v588, %v589
    %v591 = vperm.slane %v590, 0
    %v592 = vmul.f32 %v545, %v591
    %v593 = vmul.f32 %v546, %v591
    %v594 = vld [vmem:[%s11] sm:$0x1]
    %v596 = vperm.slane %v594, 0
    %v598 = vadd.f32 %v592, %v596
    %v599 = vadd.f32 %v593, %v596
    %v600 = vmax.f32 %v598, 0.0
    %v601 = vmax.f32 %v599, 0.0
    %v602 = vld [vmem:[%s3] sm:$0xff]
    %v603 = vld [vmem:[%s3 + $0x8] sm:$0xff]
    %v604 = vld [vmem:[%s3 + $0x10] sm:$0xff]
    %v605 = vld [vmem:[%s3 + $0x18] sm:$0xff]
    %v606 = vld [vmem:[%s3 + $0x20] sm:$0xff]
    %v607 = vld [vmem:[%s3 + $0x28] sm:$0xff]
    %v608 = vld [vmem:[%s3 + $0x30] sm:$0xff]
    %v609 = vld [vmem:[%s3 + $0x38] sm:$0xff]
    %v610 = vld [vmem:[%s3 + $0x40] sm:$0xff]
    %v611 = vld [vmem:[%s3 + $0x48] sm:$0xff]
    %v612 = vld [vmem:[%s3 + $0x50] sm:$0xff]
    %v613 = vld [vmem:[%s3 + $0x58] sm:$0xff]
    %v614 = vld [vmem:[%s3 + $0x60] sm:$0xff]
    %v615 = vld [vmem:[%s3 + $0x68] sm:$0xff]
    %v616 = vld [vmem:[%s3 + $0x70] sm:$0xff]
    %v617 = vld [vmem:[%s3 + $0x78] sm:$0xff]
    %618 = vmatpush.msra.mxu0 %v617
    %619 = vmatpush.msra.mxu0 %v616
    %620 = vmatpush.msra.mxu0 %v615
    %621 = vmatpush.msra.mxu0 %v614
    %622 = vmatpush.msra.mxu0 %v613
    %623 = vmatpush.msra.mxu0 %v612
    %624 = vmatpush.msra.mxu0 %v611
    %625 = vmatpush.msra.mxu0 %v610
    %626 = vmatpush.msra.mxu0 %v609
    %627 = vmatpush.msra.mxu0 %v608
    %628 = vmatpush.msra.mxu0 %v607
    %629 = vmatpush.msra.mxu0 %v606
    %630 = vmatpush.msra.mxu0 %v605
    %631 = vmatpush.msra.mxu0 %v604
    %632 = vmatpush.msra.mxu0 %v603
    %633 = vmatpush.msra.mxu0 %v602
    %634 = vmatmul.f32.gmra.mxu0 %v600
    %v635 = vpop.f32.mrf.mxu0
    %v636 = vadd.f32 0.0, %v635
    %637 = vmatmul.f32.gmra.mxu0 %v601
    %v638 = vpop.f32.mrf.mxu0
    %v639 = vadd.f32 0.0, %v638
    %640 = vdwg.mxu0
    %v641 = vld [vmem:[%s6] sm:$0xff]
    %v642 = vld [vmem:[%s6 + $0x8] sm:$0xff]
    %v643 = vld [vmem:[%s6 + $0x10] sm:$0xff]
    %v644 = vld [vmem:[%s6 + $0x18] sm:$0xff]
    %v645 = vld [vmem:[%s6 + $0x20] sm:$0xff]
    %v646 = vld [vmem:[%s6 + $0x28] sm:$0xff]
    %v647 = vld [vmem:[%s6 + $0x30] sm:$0xff]
    %v648 = vld [vmem:[%s6 + $0x38] sm:$0xff]
    %vm649 = vcmask 523264
    %v650 = vsel %vm649, %v636, 0.0
    %vm651 = vcmask 517120
    %v652 = vsel %vm651, %v639, 0.0
    %v653 = vadd.f32 %v650, %v652
    %v654 = vrot.slane %v653, 4
    %v655 = vadd.f32 %v653, %v654
    %v656 = vrot.slane %v655, 2
    %v657 = vadd.f32 %v655, %v656
    %v658 = vrot.slane %v657, 1
    %v659 = vadd.f32 %v657, %v658
    %v661 = vsel %vm649, %v659, 0
    %663 = vmatpush.msra.mxu0 0.0
    %664 = vmatpush.msra.mxu0 0.0
    %665 = vmatpush.msra.mxu0 0.0
    %666 = vmatpush.msra.mxu0 0.0
    %667 = vmatpush.msra.mxu0 0.0
    %668 = vmatpush.msra.mxu0 0.0
    %669 = vmatpush.msra.mxu0 0.0
    %670 = vmatpush.msra.mxu0 0.0
    %671 = vmatpush.msra.mxu0 %v648
    %672 = vmatpush.msra.mxu0 %v647
    %673 = vmatpush.msra.mxu0 %v646
    %674 = vmatpush.msra.mxu0 %v645
    %675 = vmatpush.msra.mxu0 %v644
    %676 = vmatpush.msra.mxu0 %v643
    %677 = vmatpush.msra.mxu0 %v642
    %678 = vmatpush.msra.mxu0 %v641
    %679 = vmatmul.f32.gmra.mxu0 %v661
    %v680 = vpop.f32.mrf.mxu0
    %v681 = vadd.f32 0.0, %v680
    %682 = vdwg.mxu0
    %v683 = vmul.f32 %v681, 0.05
    %v684 = vperm.slane %v683, 0
    %v685 = vsub.f32 %v636, %v684
    %v686 = vsub.f32 %v639, %v684
    %v687 = vmul.f32 %v685, %v685
    %v688 = vmul.f32 %v686, %v686
    %v689 = vsel %vm649, %v687, 0.0
    %v690 = vsel %vm651, %v688, 0.0
    %v691 = vadd.f32 %v689, %v690
    %v692 = vrot.slane %v691, 4
    %v693 = vadd.f32 %v691, %v692
    %v694 = vrot.slane %v693, 2
    %v695 = vadd.f32 %v693, %v694
    %v696 = vrot.slane %v695, 1
    %v697 = vadd.f32 %v695, %v696
    %v699 = vsel %vm649, %v697, 0
    %701 = vmatpush.msra.mxu0 0.0
    %702 = vmatpush.msra.mxu0 0.0
    %703 = vmatpush.msra.mxu0 0.0
    %704 = vmatpush.msra.mxu0 0.0
    %705 = vmatpush.msra.mxu0 0.0
    %706 = vmatpush.msra.mxu0 0.0
    %707 = vmatpush.msra.mxu0 0.0
    %708 = vmatpush.msra.mxu0 0.0
    %709 = vmatpush.msra.mxu0 %v648
    %710 = vmatpush.msra.mxu0 %v647
    %711 = vmatpush.msra.mxu0 %v646
    %712 = vmatpush.msra.mxu0 %v645
    %713 = vmatpush.msra.mxu0 %v644
    %714 = vmatpush.msra.mxu0 %v643
    %715 = vmatpush.msra.mxu0 %v642
    %716 = vmatpush.msra.mxu0 %v641
    %717 = vmatmul.f32.gmra.mxu0 %v699
    %v718 = vpop.f32.mrf.mxu0
    %v719 = vadd.f32 0.0, %v718
    %720 = vdwg.mxu0
    %v721 = vmul.f32 %v719, 0.05
    %v722 = vadd.f32 %v721, 1e-05
    %v723 = vrsqrt.pop %v722
    %v724 = vmul.f32 %v723, %v722
    %v725 = vmul.f32 %v724, %v723
    %v726 = vmul.f32 0.5, %v725
    %v727 = vsub.f32 1.5, %v726
    %v728 = vmul.f32 %v723, %v727
    %vm729 = vweird.f32 %v722
    %vm730 = vweird.f32 %v723
    %vm731 = vmor %vm729, %vm730
    %v732 = vsel %vm731, %v723, %v728
    %v733 = vld [vmem:[%s9] sm:$0x1]
    %v734 = vmul.f32 %v732, %v733
    %v735 = vperm.slane %v734, 0
    %v736 = vmul.f32 %v685, %v735
    %v737 = vmul.f32 %v686, %v735
    %v738 = vld [vmem:[%s12] sm:$0x1]
    %v740 = vperm.slane %v738, 0
    %v742 = vadd.f32 %v736, %v740
    %v743 = vadd.f32 %v737, %v740
    %v744 = vmax.f32 %v742, 0.0
    %v745 = vmax.f32 %v743, 0.0
    %v746 = vld [vmem:[%s4] sm:$0xff]
    %v747 = vld [vmem:[%s4 + $0x8] sm:$0xff]
    %v748 = vld [vmem:[%s4 + $0x10] sm:$0xff]
    %v749 = vld [vmem:[%s4 + $0x18] sm:$0xff]
    %v750 = vld [vmem:[%s4 + $0x20] sm:$0xff]
    %v751 = vld [vmem:[%s4 + $0x28] sm:$0xff]
    %v752 = vld [vmem:[%s4 + $0x30] sm:$0xff]
    %v753 = vld [vmem:[%s4 + $0x38] sm:$0xff]
    %v755 = vsel %vm649, %v744, 0
    %v758 = vsel %vm649, %v745, 0
    %760 = vmatpush.msra.mxu0 0.0
    %761 = vmatpush.msra.mxu0 0.0
    %762 = vmatpush.msra.mxu0 0.0
    %763 = vmatpush.msra.mxu0 0.0
    %764 = vmatpush.msra.mxu0 0.0
    %765 = vmatpush.msra.mxu0 0.0
    %766 = vmatpush.msra.mxu0 0.0
    %767 = vmatpush.msra.mxu0 0.0
    %768 = vmatpush.msra.mxu0 %v753
    %769 = vmatpush.msra.mxu0 %v752
    %770 = vmatpush.msra.mxu0 %v751
    %771 = vmatpush.msra.mxu0 %v750
    %772 = vmatpush.msra.mxu0 %v749
    %773 = vmatpush.msra.mxu0 %v748
    %774 = vmatpush.msra.mxu0 %v747
    %775 = vmatpush.msra.mxu0 %v746
    %776 = vmatmul.f32.gmra.mxu0 %v755
    %v777 = vpop.f32.mrf.mxu0
    %v778 = vadd.f32 0.0, %v777
    %779 = vmatmul.f32.gmra.mxu0 %v758
    %v780 = vpop.f32.mrf.mxu0
    %v781 = vadd.f32 0.0, %v780
    %782 = vdwg.mxu0
    %v783 = vld [vmem:[%s7] sm:$0xff]
    %v784 = vld [vmem:[%s7 + $0x8] sm:$0xff]
    %v785 = vld [vmem:[%s7 + $0x10] sm:$0xff]
    %v786 = vld [vmem:[%s7 + $0x18] sm:$0xff]
    %v787 = vsel %vm127, %v778, 0.0
    %vm788 = vcmask 254976
    %v789 = vsel %vm788, %v781, 0.0
    %v790 = vadd.f32 %v787, %v789
    %v791 = vrot.slane %v790, 4
    %v792 = vadd.f32 %v790, %v791
    %v793 = vrot.slane %v792, 2
    %v794 = vadd.f32 %v792, %v793
    %v795 = vrot.slane %v794, 1
    %v796 = vadd.f32 %v794, %v795
    %v798 = vsel %vm127, %v796, 0
    %800 = vmatpush.msra.mxu0 0.0
    %801 = vmatpush.msra.mxu0 0.0
    %802 = vmatpush.msra.mxu0 0.0
    %803 = vmatpush.msra.mxu0 0.0
    %804 = vmatpush.msra.mxu0 0.0
    %805 = vmatpush.msra.mxu0 0.0
    %806 = vmatpush.msra.mxu0 0.0
    %807 = vmatpush.msra.mxu0 0.0
    %808 = vmatpush.msra.mxu0 0.0
    %809 = vmatpush.msra.mxu0 0.0
    %810 = vmatpush.msra.mxu0 0.0
    %811 = vmatpush.msra.mxu0 0.0
    %812 = vmatpush.msra.mxu0 %v786
    %813 = vmatpush.msra.mxu0 %v785
    %814 = vmatpush.msra.mxu0 %v784
    %815 = vmatpush.msra.mxu0 %v783
    %816 = vmatmul.f32.gmra.mxu0 %v798
    %v817 = vpop.f32.mrf.mxu0
    %v818 = vadd.f32 0.0, %v817
    %819 = vdwg.mxu0
    %v820 = vmul.f32 %v818, 0.1
    %v821 = vperm.slane %v820, 0
    %v822 = vsub.f32 %v778, %v821
    %v823 = vsub.f32 %v781, %v821
    %v824 = vmul.f32 %v822, %v822
    %v825 = vmul.f32 %v823, %v823
    %v826 = vsel %vm127, %v824, 0.0
    %v827 = vsel %vm788, %v825, 0.0
    %v828 = vadd.f32 %v826, %v827
    %v829 = vrot.slane %v828, 4
    %v830 = vadd.f32 %v828, %v829
    %v831 = vrot.slane %v830, 2
    %v832 = vadd.f32 %v830, %v831
    %v833 = vrot.slane %v832, 1
    %v834 = vadd.f32 %v832, %v833
    %v836 = vsel %vm127, %v834, 0
    %838 = vmatpush.msra.mxu0 0.0
    %839 = vmatpush.msra.mxu0 0.0
    %840 = vmatpush.msra.mxu0 0.0
    %841 = vmatpush.msra.mxu0 0.0
    %842 = vmatpush.msra.mxu0 0.0
    %843 = vmatpush.msra.mxu0 0.0
    %844 = vmatpush.msra.mxu0 0.0
    %845 = vmatpush.msra.mxu0 0.0
    %846 = vmatpush.msra.mxu0 0.0
    %847 = vmatpush.msra.mxu0 0.0
    %848 = vmatpush.msra.mxu0 0.0
    %849 = vmatpush.msra.mxu0 0.0
    %850 = vmatpush.msra.mxu0 %v786
    %851 = vmatpush.msra.mxu0 %v785
    %852 = vmatpush.msra.mxu0 %v784
    %853 = vmatpush.msra.mxu0 %v783
    %854 = vmatmul.f32.gmra.mxu0 %v836
    %v855 = vpop.f32.mrf.mxu0
    %v856 = vadd.f32 0.0, %v855
    %857 = vdwg.mxu0
    %v858 = vmul.f32 %v856, 0.1
    %v859 = vadd.f32 %v858, 1e-05
    %v860 = vrsqrt.pop %v859
    %v861 = vmul.f32 %v860, %v859
    %v862 = vmul.f32 %v861, %v860
    %v863 = vmul.f32 0.5, %v862
    %v864 = vsub.f32 1.5, %v863
    %v865 = vmul.f32 %v860, %v864
    %vm866 = vweird.f32 %v859
    %vm867 = vweird.f32 %v860
    %vm868 = vmor %vm866, %vm867
    %v869 = vsel %vm868, %v860, %v865
    %v870 = vld [vmem:[%s10] sm:$0x1]
    %v871 = vmul.f32 %v869, %v870
    %v872 = vperm.slane %v871, 0
    %v873 = vmul.f32 %v822, %v872
    %v874 = vmul.f32 %v823, %v872
    %v875 = vld [vmem:[%s13] sm:$0x1]
    %v877 = vperm.slane %v875, 0
    %v879 = vadd.f32 %v873, %v877
    %v880 = vadd.f32 %v874, %v877
    %v881 = vmax.f32 %v879, 0.0
    %v882 = vmax.f32 %v880, 0.0
    %v883 = vld [vmem:[%s14] sm:$0xff]
    %v884 = vld [vmem:[%s14 + $0x8] sm:$0xff]
    %v885 = vld [vmem:[%s14 + $0x10] sm:$0xff]
    %v886 = vld [vmem:[%s14 + $0x18] sm:$0xff]
    %v887 = vld [vmem:[%s15] sm:$0x1]
    %v889 = vperm.slane %v887, 0
    %v892 = vsel %vm127, %v881, 0
    %v895 = vsel %vm127, %v882, 0
    %897 = vmatpush.msra.mxu0 0.0
    %898 = vmatpush.msra.mxu0 0.0
    %899 = vmatpush.msra.mxu0 0.0
    %900 = vmatpush.msra.mxu0 0.0
    %901 = vmatpush.msra.mxu0 0.0
    %902 = vmatpush.msra.mxu0 0.0
    %903 = vmatpush.msra.mxu0 0.0
    %904 = vmatpush.msra.mxu0 0.0
    %905 = vmatpush.msra.mxu0 0.0
    %906 = vmatpush.msra.mxu0 0.0
    %907 = vmatpush.msra.mxu0 0.0
    %908 = vmatpush.msra.mxu0 0.0
    %909 = vmatpush.msra.mxu0 %v886
    %910 = vmatpush.msra.mxu0 %v885
    %911 = vmatpush.msra.mxu0 %v884
    %912 = vmatpush.msra.mxu0 %v883
    %913 = vmatmul.f32.gmra.mxu0 %v892
    %v914 = vpop.f32.mrf.mxu0
    %v915 = vadd.f32 %v889, %v914
    %916 = vmatmul.f32.gmra.mxu0 %v895
    %v917 = vpop.f32.mrf.mxu0
    %v918 = vadd.f32 %v889, %v917
    %919 = vdwg.mxu0
    %920 = vst.msk [vmem:[%s16] sm:$0xff] %vm127, %v915
    %921 = vst.msk [vmem:[%s16 + $0x8] sm:$0x3] %vm788, %v918
    // Predicated region
    $region70: #{temporal_patches_forward.2} parent=1 // pred_check
      _
    $region71: #{temporal_patches_forward.2} parent=1 // pred_check_branch
      %923 = sbr.rel (0) target = $region73
    $region72: #{temporal_patches_forward.2} parent=1 // pred_region
      _
    $region73: #{temporal_patches_forward.2} parent=1 // pred_fallthru
      _
    // Predicated region
    $region74: #{temporal_patches_forward.2} parent=1 // pred_check
      _
    $region75: #{temporal_patches_forward.2} parent=1 // pred_check_branch
      %925 = sbr.rel (0) target = $region77
    $region76: #{temporal_patches_forward.2} parent=1 // pred_region
      _
    $region77: #{temporal_patches_forward.2} parent=1 // pred_fallthru
      _
    %926 = vsyncpa [#allocation3], 1

</llo_original>
